<compile_context>
chip_gen: v7x
topology: tpu7x:2x2x1
jax: 0.10.0
libtpu: 0.0.40
codegen_flags: <defaults>
</compile_context>

<pallas_src>
import math
import functools

import jax
import jax.numpy as jnp
from jax.experimental import pallas as pl
from jax.experimental.pallas import tpu as pltpu


def make_mha_kernel(seq: int, num_head: int, depth: int):
    d_model = num_head * depth

    def mha_kernel(q_ref, k_ref, v_ref, w_ref, b_ref, o_ref):
        # q_ref/k_ref/v_ref : (1, S, D)   one batch element per grid step
        # w_ref             : (4, D, D)   [wq^T*scale, wk^T, wv^T, wo^T], (in,out), MXU dtype
        # b_ref             : (4, 1, D)   [bq*scale, bk, bv, bo], f32
        # o_ref             : (1, S, D)
        cdt = w_ref.dtype  # MXU operand dtype (bf16 by default, f32 for exact mode)

        # --- projections: f32 accumulation + bias, then cast once to MXU dtype.
        # The softmax 1/sqrt(depth) is already folded into w_ref[0]/b_ref[0].
        qp = (jnp.dot(q_ref[0].astype(cdt), w_ref[0],
                      preferred_element_type=jnp.float32) + b_ref[0]).astype(cdt)
        kp = (jnp.dot(k_ref[0].astype(cdt), w_ref[1],
                      preferred_element_type=jnp.float32) + b_ref[1]).astype(cdt)
        vp = (jnp.dot(v_ref[0].astype(cdt), w_ref[2],
                      preferred_element_type=jnp.float32) + b_ref[2]).astype(cdt)

        # --- head split: (S, D) -> (H, S, dh). One relayout per operand.
        def split(x):
            return jnp.transpose(x.reshape(seq, num_head, depth), (1, 0, 2))

        qh, kh, vh = split(qp), split(kp), split(vp)

        # --- attention over all heads in one batched contraction each.
        # mask=None path only.
        # TODO(synk): masked_fill(mask == 0, -inf) branch not implemented
        # (PyTorch forward default is mask=None).
        s = jnp.einsum('hqd,hkd->hqk', qh, kh,
                       preferred_element_type=jnp.float32)        # (H, S, S) f32
        m = jnp.max(s, axis=-1, keepdims=True)
        p = jnp.exp(s - m)
        attn = p / jnp.sum(p, axis=-1, keepdims=True)             # exact division
        ctx = jnp.einsum('hqk,hkd->hqd', attn.astype(cdt), vh,
                         preferred_element_type=jnp.float32)      # (H, S, dh) f32

        # --- head merge: (H, S, dh) -> (S, D); matches permute(0,2,1,3).view.
        concat = jnp.transpose(ctx, (1, 0, 2)).reshape(seq, d_model)

        # --- output projection.
        out = jnp.dot(concat.astype(cdt), w_ref[3],
                      preferred_element_type=jnp.float32) + b_ref[3]
        # TODO(synk): D=32 (<128 lanes) means a masked partial store; negligible
        # at this size — fuse the consumer / widen the out block if reused at
        # large B*S.
        o_ref[0] = out.astype(o_ref.dtype)

    return mha_kernel


@functools.partial(jax.jit, static_argnames=('num_head', 'mxu_dtype'))
def multi_head_attention(q, k, v, params, *, num_head, mxu_dtype=jnp.bfloat16):
    """q, k, v: (B, S, D). params in PyTorch nn.Linear layout (W: (out,in), b: (out,))."""
    B, S, D = q.shape
    depth = D // num_head
    scale = 1.0 / math.sqrt(depth)

    # Host-side packing (tiny, fused by the surrounding jit): pre-transposed
    # (in,out) weights — no in-kernel transposes — with the softmax scale folded
    # into the q projection, stacked into one array in the MXU operand dtype.
    # TODO(synk): hoist this packing out of the per-call path if params are
    # reused across many calls.
    w = jnp.stack([params['wq'].T * scale, params['wk'].T,
                   params['wv'].T, params['wo'].T]).astype(mxu_dtype)      # (4, D, D)
    b = jnp.stack([params['bq'] * scale, params['bk'],
                   params['bv'], params['bo']]).reshape(4, 1, D)           # (4, 1, D) f32

    return pl.pallas_call(
        make_mha_kernel(S, num_head, depth),
        grid=(B,),
        in_specs=[
            pl.BlockSpec((1, S, D), lambda bi: (bi, 0, 0)),   # q
            pl.BlockSpec((1, S, D), lambda bi: (bi, 0, 0)),   # k
            pl.BlockSpec((1, S, D), lambda bi: (bi, 0, 0)),   # v
            pl.BlockSpec((4, D, D), lambda bi: (0, 0, 0)),    # packed weights
            pl.BlockSpec((4, 1, D), lambda bi: (0, 0, 0)),    # packed biases
        ],
        out_specs=pl.BlockSpec((1, S, D), lambda bi: (bi, 0, 0)),
        out_shape=jax.ShapeDtypeStruct((B, S, D), q.dtype),
        compiler_params=pltpu.CompilerParams(
            dimension_semantics=("parallel",)),   # batch axis -> both TCs on v7x
    )(q, k, v, w, b)


def init_params(key, d_model):
    """Deterministic init mirroring nn.Linear shapes: W (out,in), b (out,)."""
    ks = jax.random.split(key, 8)
    bound = 1.0 / math.sqrt(d_model)

    def lin(kw, kb):
        w = jax.random.uniform(kw, (d_model, d_model), jnp.float32, -bound, bound)
        b = jax.random.uniform(kb, (d_model,), jnp.float32, -bound, bound)
        return w, b

    wq, bq = lin(ks[0], ks[1])
    wk, bk = lin(ks[2], ks[3])
    wv, bv = lin(ks[4], ks[5])
    wo, bo = lin(ks[6], ks[7])
    return dict(wq=wq, bq=bq, wk=wk, bk=bk, wv=wv, bv=bv, wo=wo, bo=bo)


def reference_mha(q, k, v, params, *, num_head):
    """Plain-JAX f32 reference of the PyTorch forward (mask=None)."""
    B, S, D = q.shape
    depth = D // num_head

    def proj(x, w, b):
        return x @ w.T + b

    def split(x):
        return x.reshape(B, S, num_head, depth).transpose(0, 2, 1, 3)

    qh = split(proj(q, params['wq'], params['bq']))
    kh = split(proj(k, params['wk'], params['bk']))
    vh = split(proj(v, params['wv'], params['bv']))
    scores = jnp.einsum('bhqd,bhkd->bhqk', qh, kh) / math.sqrt(depth)
    attn = jax.nn.softmax(scores, axis=-1)
    ctx = jnp.einsum('bhqk,bhkd->bhqd', attn, vh)
    concat = ctx.transpose(0, 2, 1, 3).reshape(B, S, D)
    return concat @ params['wo'].T + params['bo']


if __name__ == "__main__":
    B, S, D, H = 2, 8, 32, 4
    key = jax.random.PRNGKey(0)
    kq, kk, kv, kp = jax.random.split(key, 4)
    q = jax.random.normal(kq, (B, S, D), jnp.float32)
    k = jax.random.normal(kk, (B, S, D), jnp.float32)
    v = jax.random.normal(kv, (B, S, D), jnp.float32)
    params = init_params(kp, D)

    ref = reference_mha(q, k, v, params, num_head=H)

    # 1) Exact-parity check: f32 MXU operands + exact softmax division.
    out_f32 = jax.block_until_ready(
        multi_head_attention(q, k, v, params, num_head=H, mxu_dtype=jnp.float32))
    assert out_f32.shape == (B, S, D)
    err_f32 = float(jnp.max(jnp.abs(out_f32 - ref)))
    assert jnp.allclose(out_f32, ref, atol=1e-4, rtol=1e-4), err_f32

    # 2) Default fast path: bf16 MXU operands (f32 accumulation / softmax).
    #    Tolerance reflects bf16 operand rounding only.
    out = jax.block_until_ready(
        multi_head_attention(q, k, v, params, num_head=H))
    err_bf16 = float(jnp.max(jnp.abs(out - ref)))
    assert jnp.allclose(out, ref, atol=6e-2, rtol=6e-2), err_bf16

    print("KERNEL_OK")
</pallas_src>

<mosaic_0001>
module attributes {stable_mosaic.version = 11 : i64} {
  func.func @mha_kernel(%arg0: i32, %arg1: memref<1x8x32xf32, #tpu.memory_space<vmem>>, %arg2: memref<1x8x32xf32, #tpu.memory_space<vmem>>, %arg3: memref<1x8x32xf32, #tpu.memory_space<vmem>>, %arg4: memref<4x32x32xf32, #tpu.memory_space<vmem>>, %arg5: memref<4x1x32xf32, #tpu.memory_space<vmem>>, %arg6: memref<1x8x32xf32, #tpu.memory_space<vmem>>) attributes {dimension_semantics = [#tpu.dimension_semantics<parallel>], iteration_bounds = array<i64: 2>, scalar_prefetch = 0 : i64, scratch_operands = 0 : i64, tpu.core_type = #tpu.core_type<tc>, window_params = [{transform_indices = @transform_0, window_bounds = array<i64: 1, 8, 32>}, {transform_indices = @transform_1, window_bounds = array<i64: 1, 8, 32>}, {transform_indices = @transform_2, window_bounds = array<i64: 1, 8, 32>}, {pipeline_mode = #tpu.pipeline_mode<synchronous>, transform_indices = @transform_3, window_bounds = array<i64: 4, 32, 32>}, {pipeline_mode = #tpu.pipeline_mode<synchronous>, transform_indices = @transform_4, window_bounds = array<i64: 4, 1, 32>}, {transform_indices = @transform_5, window_bounds = array<i64: 1, 8, 32>}]} {
    %c0 = arith.constant 0 : index
    %c0_0 = arith.constant 0 : index
    %c0_1 = arith.constant 0 : index
    %0 = vector.load %arg1[%c0, %c0_0, %c0_1] : memref<1x8x32xf32, #tpu.memory_space<vmem>>, vector<1x8x32xf32>
    %1 = vector.shape_cast %0 : vector<1x8x32xf32> to vector<8x32xf32>
    %c0_2 = arith.constant 0 : index
    %c0_3 = arith.constant 0 : index
    %c0_4 = arith.constant 0 : index
    %2 = vector.load %arg4[%c0_2, %c0_3, %c0_4] : memref<4x32x32xf32, #tpu.memory_space<vmem>>, vector<1x32x32xf32>
    %3 = vector.shape_cast %2 : vector<1x32x32xf32> to vector<32x32xf32>
    %cst = arith.constant dense<0.000000e+00> : vector<8x32xf32>
    %4 = tpu.matmul %1, %3, %cst {dimension_numbers = #tpu.dot_dimension_numbers<[1], [0], [0], [1], [0, 0, 1, 1], [], []>} : vector<8x32xf32>, vector<32x32xf32>, vector<8x32xf32> -> vector<8x32xf32>
    %c0_5 = arith.constant 0 : index
    %c0_6 = arith.constant 0 : index
    %c0_7 = arith.constant 0 : index
    %5 = vector.load %arg5[%c0_5, %c0_6, %c0_7] : memref<4x1x32xf32, #tpu.memory_space<vmem>>, vector<1x1x32xf32>
    %6 = vector.shape_cast %5 : vector<1x1x32xf32> to vector<1x32xf32>
    %7 = vector.broadcast %6 : vector<1x32xf32> to vector<8x32xf32>
    %8 = arith.addf %4, %7 : vector<8x32xf32>
    %c0_8 = arith.constant 0 : index
    %c0_9 = arith.constant 0 : index
    %c0_10 = arith.constant 0 : index
    %9 = vector.load %arg2[%c0_8, %c0_9, %c0_10] : memref<1x8x32xf32, #tpu.memory_space<vmem>>, vector<1x8x32xf32>
    %10 = vector.shape_cast %9 : vector<1x8x32xf32> to vector<8x32xf32>
    %c1 = arith.constant 1 : index
    %c0_11 = arith.constant 0 : index
    %c0_12 = arith.constant 0 : index
    %11 = vector.load %arg4[%c1, %c0_11, %c0_12] : memref<4x32x32xf32, #tpu.memory_space<vmem>>, vector<1x32x32xf32>
    %12 = vector.shape_cast %11 : vector<1x32x32xf32> to vector<32x32xf32>
    %cst_13 = arith.constant dense<0.000000e+00> : vector<8x32xf32>
    %13 = tpu.matmul %10, %12, %cst_13 {dimension_numbers = #tpu.dot_dimension_numbers<[1], [0], [0], [1], [0, 0, 1, 1], [], []>} : vector<8x32xf32>, vector<32x32xf32>, vector<8x32xf32> -> vector<8x32xf32>
    %c1_14 = arith.constant 1 : index
    %c0_15 = arith.constant 0 : index
    %c0_16 = arith.constant 0 : index
    %14 = vector.load %arg5[%c1_14, %c0_15, %c0_16] : memref<4x1x32xf32, #tpu.memory_space<vmem>>, vector<1x1x32xf32>
    %15 = vector.shape_cast %14 : vector<1x1x32xf32> to vector<1x32xf32>
    %16 = vector.broadcast %15 : vector<1x32xf32> to vector<8x32xf32>
    %17 = arith.addf %13, %16 : vector<8x32xf32>
    %c0_17 = arith.constant 0 : index
    %c0_18 = arith.constant 0 : index
    %c0_19 = arith.constant 0 : index
    %18 = vector.load %arg3[%c0_17, %c0_18, %c0_19] : memref<1x8x32xf32, #tpu.memory_space<vmem>>, vector<1x8x32xf32>
    %19 = vector.shape_cast %18 : vector<1x8x32xf32> to vector<8x32xf32>
    %c2 = arith.constant 2 : index
    %c0_20 = arith.constant 0 : index
    %c0_21 = arith.constant 0 : index
    %20 = vector.load %arg4[%c2, %c0_20, %c0_21] : memref<4x32x32xf32, #tpu.memory_space<vmem>>, vector<1x32x32xf32>
    %21 = vector.shape_cast %20 : vector<1x32x32xf32> to vector<32x32xf32>
    %cst_22 = arith.constant dense<0.000000e+00> : vector<8x32xf32>
    %22 = tpu.matmul %19, %21, %cst_22 {dimension_numbers = #tpu.dot_dimension_numbers<[1], [0], [0], [1], [0, 0, 1, 1], [], []>} : vector<8x32xf32>, vector<32x32xf32>, vector<8x32xf32> -> vector<8x32xf32>
    %c2_23 = arith.constant 2 : index
    %c0_24 = arith.constant 0 : index
    %c0_25 = arith.constant 0 : index
    %23 = vector.load %arg5[%c2_23, %c0_24, %c0_25] : memref<4x1x32xf32, #tpu.memory_space<vmem>>, vector<1x1x32xf32>
    %24 = vector.shape_cast %23 : vector<1x1x32xf32> to vector<1x32xf32>
    %25 = vector.broadcast %24 : vector<1x32xf32> to vector<8x32xf32>
    %26 = arith.addf %22, %25 : vector<8x32xf32>
    %27 = vector.shape_cast %8 : vector<8x32xf32> to vector<8x4x8xf32>
    %28 = tpu.transpose %27, [1, 0, 2] : vector<8x4x8xf32> -> vector<4x8x8xf32>
    %29 = vector.shape_cast %17 : vector<8x32xf32> to vector<8x4x8xf32>
    %30 = tpu.transpose %29, [1, 0, 2] : vector<8x4x8xf32> -> vector<4x8x8xf32>
    %31 = vector.shape_cast %26 : vector<8x32xf32> to vector<8x4x8xf32>
    %32 = tpu.transpose %31, [1, 0, 2] : vector<8x4x8xf32> -> vector<4x8x8xf32>
    "tpu.trace_start"() <{level = 10 : i32, message = "hqd,hkd->hqk"}> : () -> ()
    %cst_26 = arith.constant dense<0.000000e+00> : vector<4x8x8xf32>
    %33 = tpu.matmul %28, %30, %cst_26 {dimension_numbers = #tpu.dot_dimension_numbers<[2], [2], [1], [1], [0, 0, 0, 1, 1, 1], [0], [0]>} : vector<4x8x8xf32>, vector<4x8x8xf32>, vector<4x8x8xf32> -> vector<4x8x8xf32>
    "tpu.trace_stop"() : () -> ()
    %cst_27 = arith.constant dense<0xFF800000> : vector<4x8xf32>
    %34 = vector.multi_reduction <maximumf>, %33, %cst_27 [2] : vector<4x8x8xf32> to vector<4x8xf32>
    %35 = vector.shape_cast %34 : vector<4x8xf32> to vector<4x8x1xf32>
    %36 = vector.broadcast %35 : vector<4x8x1xf32> to vector<4x8x8xf32>
    %37 = arith.subf %33, %36 : vector<4x8x8xf32>
    %38 = math.exp %37 : vector<4x8x8xf32>
    %cst_28 = arith.constant dense<0.000000e+00> : vector<4x8xf32>
    %39 = vector.multi_reduction <add>, %38, %cst_28 [2] : vector<4x8x8xf32> to vector<4x8xf32>
    %40 = vector.shape_cast %39 : vector<4x8xf32> to vector<4x8x1xf32>
    %41 = vector.broadcast %40 : vector<4x8x1xf32> to vector<4x8x8xf32>
    %42 = arith.divf %38, %41 : vector<4x8x8xf32>
    "tpu.trace_start"() <{level = 10 : i32, message = "hqk,hkd->hqd"}> : () -> ()
    %cst_29 = arith.constant dense<0.000000e+00> : vector<4x8x8xf32>
    %43 = tpu.matmul %42, %32, %cst_29 {dimension_numbers = #tpu.dot_dimension_numbers<[2], [1], [1], [2], [0, 0, 0, 1, 1, 2], [0], [0]>} : vector<4x8x8xf32>, vector<4x8x8xf32>, vector<4x8x8xf32> -> vector<4x8x8xf32>
    "tpu.trace_stop"() : () -> ()
    %44 = tpu.transpose %43, [1, 0, 2] : vector<4x8x8xf32> -> vector<8x4x8xf32>
    %45 = vector.shape_cast %44 : vector<8x4x8xf32> to vector<8x32xf32>
    %c3 = arith.constant 3 : index
    %c0_30 = arith.constant 0 : index
    %c0_31 = arith.constant 0 : index
    %46 = vector.load %arg4[%c3, %c0_30, %c0_31] : memref<4x32x32xf32, #tpu.memory_space<vmem>>, vector<1x32x32xf32>
    %47 = vector.shape_cast %46 : vector<1x32x32xf32> to vector<32x32xf32>
    %cst_32 = arith.constant dense<0.000000e+00> : vector<8x32xf32>
    %48 = tpu.matmul %45, %47, %cst_32 {dimension_numbers = #tpu.dot_dimension_numbers<[1], [0], [0], [1], [0, 0, 1, 1], [], []>} : vector<8x32xf32>, vector<32x32xf32>, vector<8x32xf32> -> vector<8x32xf32>
    %c3_33 = arith.constant 3 : index
    %c0_34 = arith.constant 0 : index
    %c0_35 = arith.constant 0 : index
    %49 = vector.load %arg5[%c3_33, %c0_34, %c0_35] : memref<4x1x32xf32, #tpu.memory_space<vmem>>, vector<1x1x32xf32>
    %50 = vector.shape_cast %49 : vector<1x1x32xf32> to vector<1x32xf32>
    %51 = vector.broadcast %50 : vector<1x32xf32> to vector<8x32xf32>
    %52 = arith.addf %48, %51 : vector<8x32xf32>
    %c0_36 = arith.constant 0 : index
    %c0_37 = arith.constant 0 : index
    %c0_38 = arith.constant 0 : index
    %53 = vector.load %arg6[%c0_36, %c0_37, %c0_38] : memref<1x8x32xf32, #tpu.memory_space<vmem>>, vector<1x8x32xf32>
    %54 = vector.shape_cast %53 : vector<1x8x32xf32> to vector<8x32xf32>
    %55 = vector.shape_cast %52 : vector<8x32xf32> to vector<1x8x32xf32>
    tpu.vector_store %arg6[%c0_36, %c0_37, %c0_38], %55 {strides = array<i32>} : memref<1x8x32xf32, #tpu.memory_space<vmem>>, vector<1x8x32xf32>,
    return
  }
  func.func @transform_0(%arg0: i32) -> (i32, i32, i32) {
    %c0_i32 = arith.constant 0 : i32
    %c0_i32_0 = arith.constant 0 : i32
    %c0_i32_1 = arith.constant 0 : i32
    return %arg0, %c0_i32, %c0_i32_0 : i32, i32, i32
  }
  func.func @transform_1(%arg0: i32) -> (i32, i32, i32) {
    %c0_i32 = arith.constant 0 : i32
    %c0_i32_0 = arith.constant 0 : i32
    %c0_i32_1 = arith.constant 0 : i32
    return %arg0, %c0_i32, %c0_i32_0 : i32, i32, i32
  }
  func.func @transform_2(%arg0: i32) -> (i32, i32, i32) {
    %c0_i32 = arith.constant 0 : i32
    %c0_i32_0 = arith.constant 0 : i32
    %c0_i32_1 = arith.constant 0 : i32
    return %arg0, %c0_i32, %c0_i32_0 : i32, i32, i32
  }
  func.func @transform_3(%arg0: i32) -> (i32, i32, i32) {
    %c0_i32 = arith.constant 0 : i32
    %c0_i32_0 = arith.constant 0 : i32
    %c0_i32_1 = arith.constant 0 : i32
    %c0_i32_2 = arith.constant 0 : i32
    return %c0_i32, %c0_i32_0, %c0_i32_1 : i32, i32, i32
  }
  func.func @transform_4(%arg0: i32) -> (i32, i32, i32) {
    %c0_i32 = arith.constant 0 : i32
    %c0_i32_0 = arith.constant 0 : i32
    %c0_i32_1 = arith.constant 0 : i32
    %c0_i32_2 = arith.constant 0 : i32
    return %c0_i32, %c0_i32_0, %c0_i32_1 : i32, i32, i32
  }
  func.func @transform_5(%arg0: i32) -> (i32, i32, i32) {
    %c0_i32 = arith.constant 0 : i32
    %c0_i32_0 = arith.constant 0 : i32
    %c0_i32_1 = arith.constant 0 : i32
    return %arg0, %c0_i32, %c0_i32_0 : i32, i32, i32
  }
}

</mosaic_0001>

<llo_original>
// kernel: multi_head_attention.1
$region0: #{multi_head_attention.1}
  #allocation0 [shape = 'u32[]', space=smem, size = 0x4, offset = 0x4, fixed_abs, tag = 'smem constant byte address 0x4 - core index']
  #allocation1 [shape = 'u32[144,128]{1,0:T(1,128)}', space=vmem, size = 0x12000, scoped, tag = 'internal scratch']
  %s0 = inlined_call_operand.vmem [shape: f32[2,8,32], index: 0, kind: input, shape index: {}]
  %s1 = inlined_call_operand.vmem [shape: f32[2,8,32], index: 1, kind: input, shape index: {}]
  %s2 = inlined_call_operand.vmem [shape: f32[2,8,32], index: 2, kind: input, shape index: {}]
  %s3 = inlined_call_operand.vmem [shape: f32[4,32,32], index: 3, kind: input, shape index: {}]
  %s4 = inlined_call_operand.vmem [shape: f32[4,1,32], index: 4, kind: input, shape index: {}]
  %s5 = inlined_call_operand.hbm [shape: f32[2,8,32], index: 5, kind: output, shape index: {}]
  %s6 = sld [smem:[#allocation0]]
  $region53: #{multi_head_attention.1} parent=0
    _
  %s8 = ssub.s32 1, %s6
  %s9 = scalar_select 0, %s8, %s6
  $region1: #{multi_head_attention.1} parent=0
    #allocation2 [shape = 'u8[8192]{0}', space=vmem, size = 0x2000, scoped, tag = 'output window, operand 0']
    #allocation3 [shape = 's32[2]{0}', space=sflag, size = 0x8, scoped, tag = 'scoped memory for multi_head_attention.1']
    %10 = vsyncpa [#allocation3], 0
    %s11 = scalar_lea.sflag [#allocation3], 1
    %12 = vsyncpa %s11, 0
    loop: start=0, step=1, limit=4
    $region2: #{multi_head_attention.1} parent=1 // loop_pre_header
      _
    $region3: #{multi_head_attention.1} parent=1 // loop_header
      %s14 = sphi 0, %s18
      %p15 = scmp.ge.s32.totalorder %s14, 4
      %s24 = sphi 0, %s26
      %s27 = sphi 0, %s24
      %s28 = sphi 0, %s27
      %s44 = sphi 0, %s28
      %s50 = sphi 0, %s52
      %s53 = sphi 0, %s50
      %s54 = sphi 0, %s53
      %s70 = sphi 0, %s54
      %s76 = sphi 0, %s78
      %s79 = sphi 0, %s76
      %s80 = sphi 0, %s79
      %s96 = sphi 0, %s80
      %s100 = sphi 0, %s100
      %s102 = sphi 0, %s100
      %s103 = sphi 0, %s102
      %s117 = sphi 0, %s103
      %s121 = sphi 0, %s121
      %s123 = sphi 0, %s121
      %s124 = sphi 0, %s123
      %s138 = sphi 0, %s124
      %s144 = sphi 0, %s146
      %s147 = sphi 0, %s144
      %s148 = sphi 0, %s147
      %s164 = sphi 0, %s148
    $region4: #{multi_head_attention.1} parent=1 // loop_header_branch
      %17 = sbr.rel (%p15) target = $region8
    $region5: #{multi_head_attention.1} parent=1 // loop_body
      %s19 = ssub.s32 %s14, 1
      %s20 = ssub.s32 %s14, 2
      %s21 = sadd.s32 %s14, 1
      %s22 = ssub.s32 %s14, %s21
      %p23 = scmp.eq.s32.totalorder %s22, 0
      %s25 = sadd.s32 %s24, 1
      %s26 = scalar_select %p23, %s24, %s25
      %p29 = pneg %p23
      %p30 = scmp.eq.s32.totalorder %s14, 1
      %p31 = por %p29, %p30
      %p32 = scmp.ne.s32.totalorder %s24, %s27
      %p33 = scmp.eq.s32.totalorder %s14, 0
      %p34 = por %p32, %p33
      %p35 = scmp.ne.s32.totalorder %s24, %s27
      %p36 = scmp.eq.s32.totalorder %s19, 1
      %p37 = por %p35, %p36
      %p38 = scmp.ne.s32.totalorder %s27, %s28
      %p39 = scmp.eq.s32.totalorder %s19, 0
      %p40 = por %p38, %p39
      %p41 = scmp.ne.s32.totalorder %s27, %s28
      %p42 = scmp.eq.s32.totalorder %s20, 1
      %p43 = por %p41, %p42
      %p45 = scmp.ne.s32.totalorder %s28, %s44
      %p46 = scmp.eq.s32.totalorder %s20, 0
      %p47 = por %p45, %p46
      %s48 = ssub.s32 %s14, %s21
      %p49 = scmp.eq.s32.totalorder %s48, 0
      %s51 = sadd.s32 %s50, 1
      %s52 = scalar_select %p49, %s50, %s51
      %p55 = pneg %p49
      %p56 = scmp.eq.s32.totalorder %s14, 1
      %p57 = por %p55, %p56
      %p58 = scmp.ne.s32.totalorder %s50, %s53
      %p59 = scmp.eq.s32.totalorder %s14, 0
      %p60 = por %p58, %p59
      %p61 = scmp.ne.s32.totalorder %s50, %s53
      %p62 = scmp.eq.s32.totalorder %s19, 1
      %p63 = por %p61, %p62
      %p64 = scmp.ne.s32.totalorder %s53, %s54
      %p65 = scmp.eq.s32.totalorder %s19, 0
      %p66 = por %p64, %p65
      %p67 = scmp.ne.s32.totalorder %s53, %s54
      %p68 = scmp.eq.s32.totalorder %s20, 1
      %p69 = por %p67, %p68
      %p71 = scmp.ne.s32.totalorder %s54, %s70
      %p72 = scmp.eq.s32.totalorder %s20, 0
      %p73 = por %p71, %p72
      %s74 = ssub.s32 %s14, %s21
      %p75 = scmp.eq.s32.totalorder %s74, 0
      %s77 = sadd.s32 %s76, 1
      %s78 = scalar_select %p75, %s76, %s77
      %p81 = pneg %p75
      %p82 = scmp.eq.s32.totalorder %s14, 1
      %p83 = por %p81, %p82
      %p84 = scmp.ne.s32.totalorder %s76, %s79
      %p85 = scmp.eq.s32.totalorder %s14, 0
      %p86 = por %p84, %p85
      %p87 = scmp.ne.s32.totalorder %s76, %s79
      %p88 = scmp.eq.s32.totalorder %s19, 1
      %p89 = por %p87, %p88
      %p90 = scmp.ne.s32.totalorder %s79, %s80
      %p91 = scmp.eq.s32.totalorder %s19, 0
      %p92 = por %p90, %p91
      %p93 = scmp.ne.s32.totalorder %s79, %s80
      %p94 = scmp.eq.s32.totalorder %s20, 1
      %p95 = por %p93, %p94
      %p97 = scmp.ne.s32.totalorder %s80, %s96
      %p98 = scmp.eq.s32.totalorder %s20, 0
      %p99 = por %p97, %p98
      %s101 = sadd.s32 %s100, 1
      %p104 = scmp.eq.s32.totalorder %s14, 1
      %p105 = scmp.ne.s32.totalorder %s100, %s102
      %p106 = scmp.eq.s32.totalorder %s14, 0
      %p107 = por %p105, %p106
      %p108 = scmp.ne.s32.totalorder %s100, %s102
      %p109 = scmp.eq.s32.totalorder %s19, 1
      %p110 = por %p108, %p109
      %p111 = scmp.ne.s32.totalorder %s102, %s103
      %p112 = scmp.eq.s32.totalorder %s19, 0
      %p113 = por %p111, %p112
      %p114 = scmp.ne.s32.totalorder %s102, %s103
      %p115 = scmp.eq.s32.totalorder %s20, 1
      %p116 = por %p114, %p115
      %p118 = scmp.ne.s32.totalorder %s103, %s117
      %p119 = scmp.eq.s32.totalorder %s20, 0
      %p120 = por %p118, %p119
      %s122 = sadd.s32 %s121, 1
      %p125 = scmp.eq.s32.totalorder %s14, 1
      %p126 = scmp.ne.s32.totalorder %s121, %s123
      %p127 = scmp.eq.s32.totalorder %s14, 0
      %p128 = por %p126, %p127
      %p129 = scmp.ne.s32.totalorder %s121, %s123
      %p130 = scmp.eq.s32.totalorder %s19, 1
      %p131 = por %p129, %p130
      %p132 = scmp.ne.s32.totalorder %s123, %s124
      %p133 = scmp.eq.s32.totalorder %s19, 0
      %p134 = por %p132, %p133
      %p135 = scmp.ne.s32.totalorder %s123, %s124
      %p136 = scmp.eq.s32.totalorder %s20, 1
      %p137 = por %p135, %p136
      %p139 = scmp.ne.s32.totalorder %s124, %s138
      %p140 = scmp.eq.s32.totalorder %s20, 0
      %p141 = por %p139, %p140
      %s142 = ssub.s32 %s14, %s21
      %p143 = scmp.eq.s32.totalorder %s142, 0
      %s145 = sadd.s32 %s144, 1
      %s146 = scalar_select %p143, %s144, %s145
      %p149 = pneg %p143
      %p150 = scmp.eq.s32.totalorder %s14, 1
      %p151 = por %p149, %p150
      %p152 = scmp.ne.s32.totalorder %s144, %s147
      %p153 = scmp.eq.s32.totalorder %s14, 0
      %p154 = por %p152, %p153
      %p155 = scmp.ne.s32.totalorder %s144, %s147
      %p156 = scmp.eq.s32.totalorder %s19, 1
      %p157 = por %p155, %p156
      %p158 = scmp.ne.s32.totalorder %s147, %s148
      %p159 = scmp.eq.s32.totalorder %s19, 0
      %p160 = por %p158, %p159
      %p161 = scmp.ne.s32.totalorder %s147, %s148
      %p162 = scmp.eq.s32.totalorder %s20, 1
      %p163 = por %p161, %p162
      %p165 = scmp.ne.s32.totalorder %s148, %s164
      %p166 = scmp.eq.s32.totalorder %s20, 0
      %p167 = por %p165, %p166
      %p168 = scmp.le.s32.totalorder 1, %s14
      %p169 = scmp.lt.s32.totalorder %s14, 3
      %p170 = pnand %p168, %p169
      %p171 = pneg %p170
      // Predicated region
      $region9: #{multi_head_attention.1} parent=5 // pred_check
        _
      $region10: #{multi_head_attention.1} parent=5 // pred_check_branch
        %173 = sbr.rel (%p170) target = $region12
      $region11: #{multi_head_attention.1} parent=5 // pred_region
        %s174 = ssub.s32 %s14, 1
        // Predicated region
        $region13: #{multi_head_attention.1} parent=11 // pred_check
          %p175 = pneg %p113
        $region14: #{multi_head_attention.1} parent=11 // pred_check_branch
          %177 = sbr.rel (%p175) target = $region16
        $region15: #{multi_head_attention.1} parent=11 // pred_region
          _
        $region16: #{multi_head_attention.1} parent=11 // pred_fallthru
          _
        // Predicated region
        $region17: #{multi_head_attention.1} parent=11 // pred_check
          %p178 = pneg %p134
        $region18: #{multi_head_attention.1} parent=11 // pred_check_branch
          %180 = sbr.rel (%p178) target = $region20
        $region19: #{multi_head_attention.1} parent=11 // pred_region
          _
        $region20: #{multi_head_attention.1} parent=11 // pred_fallthru
          _
      $region12: #{multi_head_attention.1} parent=5 // pred_fallthru
        _
      %p181 = scmp.lt.s32.totalorder %s14, 2
      // Predicated region
      $region21: #{multi_head_attention.1} parent=5 // pred_check
        %p182 = pneg %p181
      $region22: #{multi_head_attention.1} parent=5 // pred_check_branch
        %184 = sbr.rel (%p182) target = $region24
      $region23: #{multi_head_attention.1} parent=5 // pred_region
        // Predicated region
        $region25: #{multi_head_attention.1} parent=23 // pred_check
          %p185 = pneg %p34
        $region26: #{multi_head_attention.1} parent=23 // pred_check_branch
          %187 = sbr.rel (%p185) target = $region28
        $region27: #{multi_head_attention.1} parent=23 // pred_region
          %p188 = scmp.lt.s32.totalorder %s14, 1
          %s189 = scalar_select %p188, %s14, 1
          %s190 = smul.addr %s189, 8
          %s191 = scalar_lea.vmem %s0, %s190
        $region28: #{multi_head_attention.1} parent=23 // pred_fallthru
          _
        // Predicated region
        $region29: #{multi_head_attention.1} parent=23 // pred_check
          %p192 = pneg %p60
        $region30: #{multi_head_attention.1} parent=23 // pred_check_branch
          %194 = sbr.rel (%p192) target = $region32
        $region31: #{multi_head_attention.1} parent=23 // pred_region
          %p195 = scmp.lt.s32.totalorder %s14, 1
          %s196 = scalar_select %p195, %s14, 1
          %s197 = smul.addr %s196, 8
          %s198 = scalar_lea.vmem %s1, %s197
        $region32: #{multi_head_attention.1} parent=23 // pred_fallthru
          _
        // Predicated region
        $region33: #{multi_head_attention.1} parent=23 // pred_check
          %p199 = pneg %p86
        $region34: #{multi_head_attention.1} parent=23 // pred_check_branch
          %201 = sbr.rel (%p199) target = $region36
        $region35: #{multi_head_attention.1} parent=23 // pred_region
          %p202 = scmp.lt.s32.totalorder %s14, 1
          %s203 = scalar_select %p202, %s14, 1
          %s204 = smul.addr %s203, 8
          %s205 = scalar_lea.vmem %s2, %s204
        $region36: #{multi_head_attention.1} parent=23 // pred_fallthru
          _
      $region24: #{multi_head_attention.1} parent=5 // pred_fallthru
        _
      %p206 = scmp.le.s32.totalorder 1, %s14
      %p207 = scmp.lt.s32.totalorder %s14, 3
      %p208 = pnand %p206, %p207
      %p209 = pneg %p208
      // Predicated region
      $region37: #{multi_head_attention.1} parent=5 // pred_check
        _
      $region38: #{multi_head_attention.1} parent=5 // pred_check_branch
        %211 = sbr.rel (%p208) target = $region40
      $region39: #{multi_head_attention.1} parent=5 // pred_region
        %s212 = ssub.s32 %s14, 1
        %p213 = scmp.lt.s32.totalorder %s19, 1
        %s214 = scalar_select %p213, %s19, 1
        %s215 = smul.addr %s214, 8
        %s216 = scalar_lea.vmem %s0, %s215
        %p217 = pneg %p40
        %p218 = pneg %p37
        %p219 = scmp.lt.s32.totalorder %s19, 1
        %s220 = scalar_select %p219, %s19, 1
        %s221 = smul.addr %s220, 8
        %s222 = scalar_lea.vmem %s1, %s221
        %p223 = pneg %p66
        %p224 = pneg %p63
        %p225 = scmp.lt.s32.totalorder %s19, 1
        %s226 = scalar_select %p225, %s19, 1
        %s227 = smul.addr %s226, 8
        %s228 = scalar_lea.vmem %s2, %s227
        %p229 = pneg %p92
        %p230 = pneg %p89
        %p231 = pneg %p113
        %p232 = pneg %p110
        %p233 = pneg %p134
        %p234 = pneg %p131
        %p235 = pneg %p160
        %p236 = pneg %p157
        %s237 = sand.u32 %s147, 1
        %s238 = scalar_lea.sflag [#allocation3], %s237
        %s239 = sand.u32 %s147, 1
        %s240 = smul.addr %s239, 8
        %s241 = scalar_lea.vmem [#allocation2], %s240
        %p242 = scmp.lt.s32.totalorder %s19, 1
        %s243 = scalar_select %p242, %s19, 1
        %s244 = smul.addr %s243, 8
        %s245 = scalar_lea.vmem %s0, %s244
        %p246 = scmp.lt.s32.totalorder %s19, 1
        %s247 = scalar_select %p246, %s19, 1
        %s248 = smul.addr %s247, 8
        %s249 = scalar_lea.vmem %s1, %s248
        %p250 = scmp.lt.s32.totalorder %s19, 1
        %s251 = scalar_select %p250, %s19, 1
        %s252 = smul.addr %s251, 8
        %s253 = scalar_lea.vmem %s2, %s252
        %v254 = vld [vmem:[%s245] sm:$0xff]
        %v255 = vld [vmem:[%s3] sm:$0xff]
        %v256 = vld [vmem:[%s3 + $0x8] sm:$0xff]
        %v257 = vld [vmem:[%s3 + $0x10] sm:$0xff]
        %v258 = vld [vmem:[%s3 + $0x18] sm:$0xff]
        %v259 = vld [vmem:[%s4] sm:$0x1]
        %v261 = vlaneseq
        %v262 = vshrl.u32 %v261, 7
        %v263 = vsub.s32 0, %v262
        %v264 = vrot.slane %v259, %v263
        %vm266 = vcmask 261120
        %v268 = vsel %vm266, %v254, 0
        %270 = vmatprep.subr.mxu0 0.0
        %271 = vmatpush1.msra.mxu0 %v255
        %272 = vmatprep.subr.mxu0 0.0
        %273 = vmatpush1.msra.mxu0 %v256
        %274 = vmatprep.subr.mxu0 0.0
        %275 = vmatpush1.msra.mxu0 %v257
        %276 = vmatprep.subr.mxu0 0.0
        %277 = vmatpush1.msra.mxu0 %v258
        %278 = vmatprep.subr.mxu0 0.0
        %279 = vmatpush1.msra.mxu0 0.0
        %280 = vmatprep.subr.mxu0 0.0
        %281 = vmatpush1.msra.mxu0 0.0
        %282 = vmatprep.subr.mxu0 0.0
        %283 = vmatpush1.msra.mxu0 0.0
        %284 = vmatprep.subr.mxu0 0.0
        %285 = vmatpush1.msra.mxu0 0.0
        %286 = vmatprep.subr.mxu0 0.0
        %287 = vmatpush1.msra.mxu0 0.0
        %288 = vmatprep.subr.mxu0 0.0
        %289 = vmatpush1.msra.mxu0 0.0
        %290 = vmatprep.subr.mxu0 0.0
        %291 = vmatpush1.msra.mxu0 0.0
        %292 = vmatprep.subr.mxu0 0.0
        %293 = vmatpush1.msra.mxu0 0.0
        %294 = vmatprep.subr.mxu0 0.0
        %295 = vmatpush1.msra.mxu0 0.0
        %296 = vmatprep.subr.mxu0 0.0
        %297 = vmatpush1.msra.mxu0 0.0
        %298 = vmatprep.subr.mxu0 0.0
        %299 = vmatpush1.msra.mxu0 0.0
        %300 = vmatprep.subr.mxu0 0.0
        %301 = vmatpush1.msra.mxu0 0.0
        %302 = vmatprep.subr.mxu0 0.0
        %303 = vmatpush1.msra.mxu0 0.0
        %304 = vmatprep.subr.mxu0 0.0
        %305 = vmatpush1.msra.mxu0 0.0
        %306 = vmatprep.subr.mxu0 0.0
        %307 = vmatpush1.msra.mxu0 0.0
        %308 = vmatprep.subr.mxu0 0.0
        %309 = vmatpush1.msra.mxu0 0.0
        %310 = vmatprep.subr.mxu0 0.0
        %311 = vmatpush1.msra.mxu0 0.0
        %312 = vmatprep.subr.mxu0 0.0
        %313 = vmatpush1.msra.mxu0 0.0
        %314 = vmatprep.subr.mxu0 0.0
        %315 = vmatpush1.msra.mxu0 0.0
        %316 = vmatprep.subr.mxu0 0.0
        %317 = vmatpush1.msra.mxu0 0.0
        %318 = vmatprep.subr.mxu0 0.0
        %319 = vmatpush1.msra.mxu0 0.0
        %320 = vmatprep.subr.mxu0 0.0
        %321 = vmatpush1.msra.mxu0 0.0
        %322 = vmatprep.subr.mxu0 0.0
        %323 = vmatpush1.msra.mxu0 0.0
        %324 = vmatprep.subr.mxu0 0.0
        %325 = vmatpush1.msra.mxu0 0.0
        %326 = vmatprep.subr.mxu0 0.0
        %327 = vmatpush1.msra.mxu0 0.0
        %328 = vmatprep.subr.mxu0 0.0
        %329 = vmatpush1.msra.mxu0 0.0
        %330 = vmatprep.subr.mxu0 0.0
        %331 = vmatpush1.msra.mxu0 0.0
        %332 = vmatprep.subr.mxu0 0.0
        %333 = vmatpush1.msra.mxu0 0.0
        %334 = vmatprep.mubr.f32.mxu0 0.0
        %335 = vmatmul.mubr.f32.gmra.mrb[0].mxu0 %v268
        %v336 = vpop.f32.mrb[0].mxu0
        %v337 = vadd.f32 %v264, %v336
        %v338 = vpop.f32.mrb[0].mxu0
        %339 = vdwg.mxu0
        %v340 = vld [vmem:[%s249] sm:$0xff]
        %s341 = scalar_lea.vmem %s3, 32
        %v342 = vld [vmem:[%s341] sm:$0xff]
        %v343 = vld [vmem:[%s341 + $0x8] sm:$0xff]
        %v344 = vld [vmem:[%s341 + $0x10] sm:$0xff]
        %v345 = vld [vmem:[%s341 + $0x18] sm:$0xff]
        %s346 = scalar_lea.vmem %s4, 1
        %v347 = vld [vmem:[%s346] sm:$0x1]
        %v349 = vlaneseq
        %v350 = vshrl.u32 %v349, 7
        %v351 = vsub.s32 0, %v350
        %v352 = vrot.slane %v347, %v351
        %v355 = vsel %vm266, %v340, 0
        %357 = vmatprep.subr.mxu0 0.0
        %358 = vmatpush1.msra.mxu0 %v342
        %359 = vmatprep.subr.mxu0 0.0
        %360 = vmatpush1.msra.mxu0 %v343
        %361 = vmatprep.subr.mxu0 0.0
        %362 = vmatpush1.msra.mxu0 %v344
        %363 = vmatprep.subr.mxu0 0.0
        %364 = vmatpush1.msra.mxu0 %v345
        %365 = vmatprep.subr.mxu0 0.0
        %366 = vmatpush1.msra.mxu0 0.0
        %367 = vmatprep.subr.mxu0 0.0
        %368 = vmatpush1.msra.mxu0 0.0
        %369 = vmatprep.subr.mxu0 0.0
        %370 = vmatpush1.msra.mxu0 0.0
        %371 = vmatprep.subr.mxu0 0.0
        %372 = vmatpush1.msra.mxu0 0.0
        %373 = vmatprep.subr.mxu0 0.0
        %374 = vmatpush1.msra.mxu0 0.0
        %375 = vmatprep.subr.mxu0 0.0
        %376 = vmatpush1.msra.mxu0 0.0
        %377 = vmatprep.subr.mxu0 0.0
        %378 = vmatpush1.msra.mxu0 0.0
        %379 = vmatprep.subr.mxu0 0.0
        %380 = vmatpush1.msra.mxu0 0.0
        %381 = vmatprep.subr.mxu0 0.0
        %382 = vmatpush1.msra.mxu0 0.0
        %383 = vmatprep.subr.mxu0 0.0
        %384 = vmatpush1.msra.mxu0 0.0
        %385 = vmatprep.subr.mxu0 0.0
        %386 = vmatpush1.msra.mxu0 0.0
        %387 = vmatprep.subr.mxu0 0.0
        %388 = vmatpush1.msra.mxu0 0.0
        %389 = vmatprep.subr.mxu0 0.0
        %390 = vmatpush1.msra.mxu0 0.0
        %391 = vmatprep.subr.mxu0 0.0
        %392 = vmatpush1.msra.mxu0 0.0
        %393 = vmatprep.subr.mxu0 0.0
        %394 = vmatpush1.msra.mxu0 0.0
        %395 = vmatprep.subr.mxu0 0.0
        %396 = vmatpush1.msra.mxu0 0.0
        %397 = vmatprep.subr.mxu0 0.0
        %398 = vmatpush1.msra.mxu0 0.0
        %399 = vmatprep.subr.mxu0 0.0
        %400 = vmatpush1.msra.mxu0 0.0
        %401 = vmatprep.subr.mxu0 0.0
        %402 = vmatpush1.msra.mxu0 0.0
        %403 = vmatprep.subr.mxu0 0.0
        %404 = vmatpush1.msra.mxu0 0.0
        %405 = vmatprep.subr.mxu0 0.0
        %406 = vmatpush1.msra.mxu0 0.0
        %407 = vmatprep.subr.mxu0 0.0
        %408 = vmatpush1.msra.mxu0 0.0
        %409 = vmatprep.subr.mxu0 0.0
        %410 = vmatpush1.msra.mxu0 0.0
        %411 = vmatprep.subr.mxu0 0.0
        %412 = vmatpush1.msra.mxu0 0.0
        %413 = vmatprep.subr.mxu0 0.0
        %414 = vmatpush1.msra.mxu0 0.0
        %415 = vmatprep.subr.mxu0 0.0
        %416 = vmatpush1.msra.mxu0 0.0
        %417 = vmatprep.subr.mxu0 0.0
        %418 = vmatpush1.msra.mxu0 0.0
        %419 = vmatprep.subr.mxu0 0.0
        %420 = vmatpush1.msra.mxu0 0.0
        %421 = vmatprep.mubr.f32.mxu0 0.0
        %422 = vmatmul.mubr.f32.gmra.mrb[0].mxu0 %v355
        %v423 = vpop.f32.mrb[0].mxu0
        %v424 = vadd.f32 %v352, %v423
        %v425 = vpop.f32.mrb[0].mxu0
        %426 = vdwg.mxu0
        %v427 = vld [vmem:[%s253] sm:$0xff]
        %s428 = scalar_lea.vmem %s3, 64
        %v429 = vld [vmem:[%s428] sm:$0xff]
        %v430 = vld [vmem:[%s428 + $0x8] sm:$0xff]
        %v431 = vld [vmem:[%s428 + $0x10] sm:$0xff]
        %v432 = vld [vmem:[%s428 + $0x18] sm:$0xff]
        %s433 = scalar_lea.vmem %s4, 2
        %v434 = vld [vmem:[%s433] sm:$0x1]
        %v436 = vlaneseq
        %v437 = vshrl.u32 %v436, 7
        %v438 = vsub.s32 0, %v437
        %v439 = vrot.slane %v434, %v438
        %v442 = vsel %vm266, %v427, 0
        %444 = vmatprep.subr.mxu0 0.0
        %445 = vmatpush1.msra.mxu0 %v429
        %446 = vmatprep.subr.mxu0 0.0
        %447 = vmatpush1.msra.mxu0 %v430
        %448 = vmatprep.subr.mxu0 0.0
        %449 = vmatpush1.msra.mxu0 %v431
        %450 = vmatprep.subr.mxu0 0.0
        %451 = vmatpush1.msra.mxu0 %v432
        %452 = vmatprep.subr.mxu0 0.0
        %453 = vmatpush1.msra.mxu0 0.0
        %454 = vmatprep.subr.mxu0 0.0
        %455 = vmatpush1.msra.mxu0 0.0
        %456 = vmatprep.subr.mxu0 0.0
        %457 = vmatpush1.msra.mxu0 0.0
        %458 = vmatprep.subr.mxu0 0.0
        %459 = vmatpush1.msra.mxu0 0.0
        %460 = vmatprep.subr.mxu0 0.0
        %461 = vmatpush1.msra.mxu0 0.0
        %462 = vmatprep.subr.mxu0 0.0
        %463 = vmatpush1.msra.mxu0 0.0
        %464 = vmatprep.subr.mxu0 0.0
        %465 = vmatpush1.msra.mxu0 0.0
        %466 = vmatprep.subr.mxu0 0.0
        %467 = vmatpush1.msra.mxu0 0.0
        %468 = vmatprep.subr.mxu0 0.0
        %469 = vmatpush1.msra.mxu0 0.0
        %470 = vmatprep.subr.mxu0 0.0
        %471 = vmatpush1.msra.mxu0 0.0
        %472 = vmatprep.subr.mxu0 0.0
        %473 = vmatpush1.msra.mxu0 0.0
        %474 = vmatprep.subr.mxu0 0.0
        %475 = vmatpush1.msra.mxu0 0.0
        %476 = vmatprep.subr.mxu0 0.0
        %477 = vmatpush1.msra.mxu0 0.0
        %478 = vmatprep.subr.mxu0 0.0
        %479 = vmatpush1.msra.mxu0 0.0
        %480 = vmatprep.subr.mxu0 0.0
        %481 = vmatpush1.msra.mxu0 0.0
        %482 = vmatprep.subr.mxu0 0.0
        %483 = vmatpush1.msra.mxu0 0.0
        %484 = vmatprep.subr.mxu0 0.0
        %485 = vmatpush1.msra.mxu0 0.0
        %486 = vmatprep.subr.mxu0 0.0
        %487 = vmatpush1.msra.mxu0 0.0
        %488 = vmatprep.subr.mxu0 0.0
        %489 = vmatpush1.msra.mxu0 0.0
        %490 = vmatprep.subr.mxu0 0.0
        %491 = vmatpush1.msra.mxu0 0.0
        %492 = vmatprep.subr.mxu0 0.0
        %493 = vmatpush1.msra.mxu0 0.0
        %494 = vmatprep.subr.mxu0 0.0
        %495 = vmatpush1.msra.mxu0 0.0
        %496 = vmatprep.subr.mxu0 0.0
        %497 = vmatpush1.msra.mxu0 0.0
        %498 = vmatprep.subr.mxu0 0.0
        %499 = vmatpush1.msra.mxu0 0.0
        %500 = vmatprep.subr.mxu0 0.0
        %501 = vmatpush1.msra.mxu0 0.0
        %502 = vmatprep.subr.mxu0 0.0
        %503 = vmatpush1.msra.mxu0 0.0
        %504 = vmatprep.subr.mxu0 0.0
        %505 = vmatpush1.msra.mxu0 0.0
        %506 = vmatprep.subr.mxu0 0.0
        %507 = vmatpush1.msra.mxu0 0.0
        %508 = vmatprep.mubr.f32.mxu0 0.0
        %509 = vmatmul.mubr.f32.gmra.mrb[0].mxu0 %v442
        %v510 = vpop.f32.mrb[0].mxu0
        %v511 = vadd.f32 %v439, %v510
        %v512 = vpop.f32.mrb[0].mxu0
        %513 = vdwg.mxu0
        %515 = vrot.lane.b32.xlu0 %v337, 120
        %v516 = vpop.permute.xlu0 %515
        %518 = vrot.lane.b32.xlu0 %v337, 112
        %v519 = vpop.permute.xlu0 %518
        %521 = vrot.lane.b32.xlu0 %v337, 104
        %v522 = vpop.permute.xlu0 %521
        %v524 = vcombine.low %v337, %v519
        %v525 = vcombine.high %v337, %v519
        %v527 = vunpack.c.l.s4 1983009808
        %v528 = vunpack.c.0.s8 %v527
        %v529 = vlaneseq
        %v530 = vshrl.u32 %v529, 7
        %v531 = vsub.s32 %v528, %v530
        %v532 = vrot.slane %v524, %v531
        %v534 = vunpack.c.l.s4 1983009808
        %v535 = vunpack.c.0.s8 %v534
        %v536 = vlaneseq
        %v537 = vshrl.u32 %v536, 7
        %v538 = vsub.s32 %v535, %v537
        %v539 = vrot.slane %v525, %v538
        %v540 = vcombine.low %v516, %v522
        %v541 = vcombine.high %v516, %v522
        %v543 = vunpack.c.l.s4 1983009808
        %v544 = vunpack.c.0.s8 %v543
        %v545 = vlaneseq
        %v546 = vshrl.u32 %v545, 7
        %v547 = vsub.s32 %v544, %v546
        %v548 = vrot.slane %v540, %v547
        %v550 = vunpack.c.l.s4 1983009808
        %v551 = vunpack.c.0.s8 %v550
        %v552 = vlaneseq
        %v553 = vshrl.u32 %v552, 7
        %v554 = vsub.s32 %v551, %v553
        %v555 = vrot.slane %v541, %v554
        %v556 = vcombine.low %v532, %v548
        %v557 = vcombine.high %v532, %v548
        %v559 = vunpack.c.l.s4 1934713408
        %v560 = vunpack.c.0.s8 %v559
        %v561 = vlaneseq
        %v562 = vshrl.u32 %v561, 7
        %v563 = vsub.s32 %v560, %v562
        %v564 = vrot.slane %v556, %v563
        %v566 = vunpack.c.l.s4 1934713408
        %v567 = vunpack.c.0.s8 %v566
        %v568 = vlaneseq
        %v569 = vshrl.u32 %v568, 7
        %v570 = vsub.s32 %v567, %v569
        %v571 = vrot.slane %v557, %v570
        %v572 = vcombine.low %v539, %v555
        %v573 = vcombine.high %v539, %v555
        %v575 = vunpack.c.l.s4 1934713408
        %v576 = vunpack.c.0.s8 %v575
        %v577 = vlaneseq
        %v578 = vshrl.u32 %v577, 7
        %v579 = vsub.s32 %v576, %v578
        %v580 = vrot.slane %v572, %v579
        %v582 = vunpack.c.l.s4 1934713408
        %v583 = vunpack.c.0.s8 %v582
        %v584 = vlaneseq
        %v585 = vshrl.u32 %v584, 7
        %v586 = vsub.s32 %v583, %v585
        %v587 = vrot.slane %v573, %v586
        %v588 = vcombine.high %v564, 0.0
        %v589 = vcombine.high %v571, 0.0
        %v590 = vcombine.high %v580, 0.0
        %v591 = vcombine.high %v587, 0.0
        %v592 = vcombine.low %v564, %v571
        %v594 = vunpack.c.l.s4 1983009808
        %v595 = vunpack.c.0.s8 %v594
        %v596 = vlaneseq
        %v597 = vshrl.u32 %v596, 7
        %v598 = vsub.s32 %v595, %v597
        %v599 = vrot.slane %v592, %v598
        %v600 = vcombine.low %v588, %v589
        %v602 = vunpack.c.l.s4 1983009808
        %v603 = vunpack.c.0.s8 %v602
        %v604 = vlaneseq
        %v605 = vshrl.u32 %v604, 7
        %v606 = vsub.s32 %v603, %v605
        %v607 = vrot.slane %v600, %v606
        %v608 = vcombine.low %v580, %v587
        %v610 = vunpack.c.l.s4 1983009808
        %v611 = vunpack.c.0.s8 %v610
        %v612 = vlaneseq
        %v613 = vshrl.u32 %v612, 7
        %v614 = vsub.s32 %v611, %v613
        %v615 = vrot.slane %v608, %v614
        %v616 = vcombine.low %v590, %v591
        %v618 = vunpack.c.l.s4 1983009808
        %v619 = vunpack.c.0.s8 %v618
        %v620 = vlaneseq
        %v621 = vshrl.u32 %v620, 7
        %v622 = vsub.s32 %v619, %v621
        %v623 = vrot.slane %v616, %v622
        %v624 = vcombine.low %v599, %v607
        %v625 = vcombine.high %v599, %v607
        %v627 = vunpack.c.l.s4 1934713408
        %v628 = vunpack.c.0.s8 %v627
        %v629 = vlaneseq
        %v630 = vshrl.u32 %v629, 7
        %v631 = vsub.s32 %v628, %v630
        %v632 = vrot.slane %v624, %v631
        %v634 = vunpack.c.l.s4 1934713408
        %v635 = vunpack.c.0.s8 %v634
        %v636 = vlaneseq
        %v637 = vshrl.u32 %v636, 7
        %v638 = vsub.s32 %v635, %v637
        %v639 = vrot.slane %v625, %v638
        %v640 = vcombine.low %v615, %v623
        %v641 = vcombine.high %v615, %v623
        %v643 = vunpack.c.l.s4 1934713408
        %v644 = vunpack.c.0.s8 %v643
        %v645 = vlaneseq
        %v646 = vshrl.u32 %v645, 7
        %v647 = vsub.s32 %v644, %v646
        %v648 = vrot.slane %v640, %v647
        %v650 = vunpack.c.l.s4 1934713408
        %v651 = vunpack.c.0.s8 %v650
        %v652 = vlaneseq
        %v653 = vshrl.u32 %v652, 7
        %v654 = vsub.s32 %v651, %v653
        %v655 = vrot.slane %v641, %v654
        %v656 = vcombine.low %v632, %v648
        %v657 = vcombine.high %v632, %v648
        %v658 = vcombine.low %v639, %v655
        %v659 = vcombine.high %v639, %v655
        %661 = vrot.lane.b32.xlu0 %v424, 120
        %v662 = vpop.permute.xlu0 %661
        %664 = vrot.lane.b32.xlu0 %v424, 112
        %v665 = vpop.permute.xlu0 %664
        %667 = vrot.lane.b32.xlu0 %v424, 104
        %v668 = vpop.permute.xlu0 %667
        %v670 = vcombine.low %v424, %v665
        %v671 = vcombine.high %v424, %v665
        %v673 = vunpack.c.l.s4 1983009808
        %v674 = vunpack.c.0.s8 %v673
        %v675 = vlaneseq
        %v676 = vshrl.u32 %v675, 7
        %v677 = vsub.s32 %v674, %v676
        %v678 = vrot.slane %v670, %v677
        %v680 = vunpack.c.l.s4 1983009808
        %v681 = vunpack.c.0.s8 %v680
        %v682 = vlaneseq
        %v683 = vshrl.u32 %v682, 7
        %v684 = vsub.s32 %v681, %v683
        %v685 = vrot.slane %v671, %v684
        %v686 = vcombine.low %v662, %v668
        %v687 = vcombine.high %v662, %v668
        %v689 = vunpack.c.l.s4 1983009808
        %v690 = vunpack.c.0.s8 %v689
        %v691 = vlaneseq
        %v692 = vshrl.u32 %v691, 7
        %v693 = vsub.s32 %v690, %v692
        %v694 = vrot.slane %v686, %v693
        %v696 = vunpack.c.l.s4 1983009808
        %v697 = vunpack.c.0.s8 %v696
        %v698 = vlaneseq
        %v699 = vshrl.u32 %v698, 7
        %v700 = vsub.s32 %v697, %v699
        %v701 = vrot.slane %v687, %v700
        %v702 = vcombine.low %v678, %v694
        %v703 = vcombine.high %v678, %v694
        %v705 = vunpack.c.l.s4 1934713408
        %v706 = vunpack.c.0.s8 %v705
        %v707 = vlaneseq
        %v708 = vshrl.u32 %v707, 7
        %v709 = vsub.s32 %v706, %v708
        %v710 = vrot.slane %v702, %v709
        %v712 = vunpack.c.l.s4 1934713408
        %v713 = vunpack.c.0.s8 %v712
        %v714 = vlaneseq
        %v715 = vshrl.u32 %v714, 7
        %v716 = vsub.s32 %v713, %v715
        %v717 = vrot.slane %v703, %v716
        %v718 = vcombine.low %v685, %v701
        %v719 = vcombine.high %v685, %v701
        %v721 = vunpack.c.l.s4 1934713408
        %v722 = vunpack.c.0.s8 %v721
        %v723 = vlaneseq
        %v724 = vshrl.u32 %v723, 7
        %v725 = vsub.s32 %v722, %v724
        %v726 = vrot.slane %v718, %v725
        %v728 = vunpack.c.l.s4 1934713408
        %v729 = vunpack.c.0.s8 %v728
        %v730 = vlaneseq
        %v731 = vshrl.u32 %v730, 7
        %v732 = vsub.s32 %v729, %v731
        %v733 = vrot.slane %v719, %v732
        %v734 = vcombine.high %v710, 0.0
        %v735 = vcombine.high %v717, 0.0
        %v736 = vcombine.high %v726, 0.0
        %v737 = vcombine.high %v733, 0.0
        %v738 = vcombine.low %v710, %v717
        %v740 = vunpack.c.l.s4 1983009808
        %v741 = vunpack.c.0.s8 %v740
        %v742 = vlaneseq
        %v743 = vshrl.u32 %v742, 7
        %v744 = vsub.s32 %v741, %v743
        %v745 = vrot.slane %v738, %v744
        %v746 = vcombine.low %v734, %v735
        %v748 = vunpack.c.l.s4 1983009808
        %v749 = vunpack.c.0.s8 %v748
        %v750 = vlaneseq
        %v751 = vshrl.u32 %v750, 7
        %v752 = vsub.s32 %v749, %v751
        %v753 = vrot.slane %v746, %v752
        %v754 = vcombine.low %v726, %v733
        %v756 = vunpack.c.l.s4 1983009808
        %v757 = vunpack.c.0.s8 %v756
        %v758 = vlaneseq
        %v759 = vshrl.u32 %v758, 7
        %v760 = vsub.s32 %v757, %v759
        %v761 = vrot.slane %v754, %v760
        %v762 = vcombine.low %v736, %v737
        %v764 = vunpack.c.l.s4 1983009808
        %v765 = vunpack.c.0.s8 %v764
        %v766 = vlaneseq
        %v767 = vshrl.u32 %v766, 7
        %v768 = vsub.s32 %v765, %v767
        %v769 = vrot.slane %v762, %v768
        %v770 = vcombine.low %v745, %v753
        %v771 = vcombine.high %v745, %v753
        %v773 = vunpack.c.l.s4 1934713408
        %v774 = vunpack.c.0.s8 %v773
        %v775 = vlaneseq
        %v776 = vshrl.u32 %v775, 7
        %v777 = vsub.s32 %v774, %v776
        %v778 = vrot.slane %v770, %v777
        %v780 = vunpack.c.l.s4 1934713408
        %v781 = vunpack.c.0.s8 %v780
        %v782 = vlaneseq
        %v783 = vshrl.u32 %v782, 7
        %v784 = vsub.s32 %v781, %v783
        %v785 = vrot.slane %v771, %v784
        %v786 = vcombine.low %v761, %v769
        %v787 = vcombine.high %v761, %v769
        %v789 = vunpack.c.l.s4 1934713408
        %v790 = vunpack.c.0.s8 %v789
        %v791 = vlaneseq
        %v792 = vshrl.u32 %v791, 7
        %v793 = vsub.s32 %v790, %v792
        %v794 = vrot.slane %v786, %v793
        %v796 = vunpack.c.l.s4 1934713408
        %v797 = vunpack.c.0.s8 %v796
        %v798 = vlaneseq
        %v799 = vshrl.u32 %v798, 7
        %v800 = vsub.s32 %v797, %v799
        %v801 = vrot.slane %v787, %v800
        %v802 = vcombine.low %v778, %v794
        %v803 = vcombine.high %v778, %v794
        %v804 = vcombine.low %v785, %v801
        %v805 = vcombine.high %v785, %v801
        %807 = vrot.lane.b32.xlu0 %v511, 120
        %v808 = vpop.permute.xlu0 %807
        %810 = vrot.lane.b32.xlu0 %v511, 112
        %v811 = vpop.permute.xlu0 %810
        %813 = vrot.lane.b32.xlu0 %v511, 104
        %v814 = vpop.permute.xlu0 %813
        %v816 = vcombine.low %v511, %v811
        %v817 = vcombine.high %v511, %v811
        %v819 = vunpack.c.l.s4 1983009808
        %v820 = vunpack.c.0.s8 %v819
        %v821 = vlaneseq
        %v822 = vshrl.u32 %v821, 7
        %v823 = vsub.s32 %v820, %v822
        %v824 = vrot.slane %v816, %v823
        %v826 = vunpack.c.l.s4 1983009808
        %v827 = vunpack.c.0.s8 %v826
        %v828 = vlaneseq
        %v829 = vshrl.u32 %v828, 7
        %v830 = vsub.s32 %v827, %v829
        %v831 = vrot.slane %v817, %v830
        %v832 = vcombine.low %v808, %v814
        %v833 = vcombine.high %v808, %v814
        %v835 = vunpack.c.l.s4 1983009808
        %v836 = vunpack.c.0.s8 %v835
        %v837 = vlaneseq
        %v838 = vshrl.u32 %v837, 7
        %v839 = vsub.s32 %v836, %v838
        %v840 = vrot.slane %v832, %v839
        %v842 = vunpack.c.l.s4 1983009808
        %v843 = vunpack.c.0.s8 %v842
        %v844 = vlaneseq
        %v845 = vshrl.u32 %v844, 7
        %v846 = vsub.s32 %v843, %v845
        %v847 = vrot.slane %v833, %v846
        %v848 = vcombine.low %v824, %v840
        %v849 = vcombine.high %v824, %v840
        %v851 = vunpack.c.l.s4 1934713408
        %v852 = vunpack.c.0.s8 %v851
        %v853 = vlaneseq
        %v854 = vshrl.u32 %v853, 7
        %v855 = vsub.s32 %v852, %v854
        %v856 = vrot.slane %v848, %v855
        %v858 = vunpack.c.l.s4 1934713408
        %v859 = vunpack.c.0.s8 %v858
        %v860 = vlaneseq
        %v861 = vshrl.u32 %v860, 7
        %v862 = vsub.s32 %v859, %v861
        %v863 = vrot.slane %v849, %v862
        %v864 = vcombine.low %v831, %v847
        %v865 = vcombine.high %v831, %v847
        %v867 = vunpack.c.l.s4 1934713408
        %v868 = vunpack.c.0.s8 %v867
        %v869 = vlaneseq
        %v870 = vshrl.u32 %v869, 7
        %v871 = vsub.s32 %v868, %v870
        %v872 = vrot.slane %v864, %v871
        %v874 = vunpack.c.l.s4 1934713408
        %v875 = vunpack.c.0.s8 %v874
        %v876 = vlaneseq
        %v877 = vshrl.u32 %v876, 7
        %v878 = vsub.s32 %v875, %v877
        %v879 = vrot.slane %v865, %v878
        %v880 = vcombine.high %v856, 0.0
        %v881 = vcombine.high %v863, 0.0
        %v882 = vcombine.high %v872, 0.0
        %v883 = vcombine.high %v879, 0.0
        %v884 = vcombine.low %v856, %v863
        %v886 = vunpack.c.l.s4 1983009808
        %v887 = vunpack.c.0.s8 %v886
        %v888 = vlaneseq
        %v889 = vshrl.u32 %v888, 7
        %v890 = vsub.s32 %v887, %v889
        %v891 = vrot.slane %v884, %v890
        %v892 = vcombine.low %v880, %v881
        %v894 = vunpack.c.l.s4 1983009808
        %v895 = vunpack.c.0.s8 %v894
        %v896 = vlaneseq
        %v897 = vshrl.u32 %v896, 7
        %v898 = vsub.s32 %v895, %v897
        %v899 = vrot.slane %v892, %v898
        %v900 = vcombine.low %v872, %v879
        %v902 = vunpack.c.l.s4 1983009808
        %v903 = vunpack.c.0.s8 %v902
        %v904 = vlaneseq
        %v905 = vshrl.u32 %v904, 7
        %v906 = vsub.s32 %v903, %v905
        %v907 = vrot.slane %v900, %v906
        %v908 = vcombine.low %v882, %v883
        %v910 = vunpack.c.l.s4 1983009808
        %v911 = vunpack.c.0.s8 %v910
        %v912 = vlaneseq
        %v913 = vshrl.u32 %v912, 7
        %v914 = vsub.s32 %v911, %v913
        %v915 = vrot.slane %v908, %v914
        %v916 = vcombine.low %v891, %v899
        %v917 = vcombine.high %v891, %v899
        %v919 = vunpack.c.l.s4 1934713408
        %v920 = vunpack.c.0.s8 %v919
        %v921 = vlaneseq
        %v922 = vshrl.u32 %v921, 7
        %v923 = vsub.s32 %v920, %v922
        %v924 = vrot.slane %v916, %v923
        %v926 = vunpack.c.l.s4 1934713408
        %v927 = vunpack.c.0.s8 %v926
        %v928 = vlaneseq
        %v929 = vshrl.u32 %v928, 7
        %v930 = vsub.s32 %v927, %v929
        %v931 = vrot.slane %v917, %v930
        %v932 = vcombine.low %v907, %v915
        %v933 = vcombine.high %v907, %v915
        %v935 = vunpack.c.l.s4 1934713408
        %v936 = vunpack.c.0.s8 %v935
        %v937 = vlaneseq
        %v938 = vshrl.u32 %v937, 7
        %v939 = vsub.s32 %v936, %v938
        %v940 = vrot.slane %v932, %v939
        %v942 = vunpack.c.l.s4 1934713408
        %v943 = vunpack.c.0.s8 %v942
        %v944 = vlaneseq
        %v945 = vshrl.u32 %v944, 7
        %v946 = vsub.s32 %v943, %v945
        %v947 = vrot.slane %v933, %v946
        %v948 = vcombine.low %v924, %v940
        %v949 = vcombine.high %v924, %v940
        %v950 = vcombine.low %v931, %v947
        %v951 = vcombine.high %v931, %v947
        %vm952 = vcmask 64512
        %v954 = vsel %vm952, %v656, 0
        %v957 = vsel %vm952, %v802, 0
        %959 = vmatprep.subr.mxu0 0.0
        %960 = vmatpush1.xpose.msra.mxu0 %v957
        %961 = vmatprep.subr.mxu0 0.0
        %962 = vmatpush1.xpose.msra.mxu0 0.0
        %963 = vmatprep.subr.mxu0 0.0
        %964 = vmatpush1.xpose.msra.mxu0 0.0
        %965 = vmatprep.subr.mxu0 0.0
        %966 = vmatpush1.xpose.msra.mxu0 0.0
        %967 = vmatprep.subr.mxu0 0.0
        %968 = vmatpush1.xpose.msra.mxu0 0.0
        %969 = vmatprep.subr.mxu0 0.0
        %970 = vmatpush1.xpose.msra.mxu0 0.0
        %971 = vmatprep.subr.mxu0 0.0
        %972 = vmatpush1.xpose.msra.mxu0 0.0
        %973 = vmatprep.subr.mxu0 0.0
        %974 = vmatpush1.xpose.msra.mxu0 0.0
        %975 = vmatprep.subr.mxu0 0.0
        %976 = vmatpush1.xpose.msra.mxu0 0.0
        %977 = vmatprep.subr.mxu0 0.0
        %978 = vmatpush1.xpose.msra.mxu0 0.0
        %979 = vmatprep.subr.mxu0 0.0
        %980 = vmatpush1.xpose.msra.mxu0 0.0
        %981 = vmatprep.subr.mxu0 0.0
        %982 = vmatpush1.xpose.msra.mxu0 0.0
        %983 = vmatprep.subr.mxu0 0.0
        %984 = vmatpush1.xpose.msra.mxu0 0.0
        %985 = vmatprep.subr.mxu0 0.0
        %986 = vmatpush1.xpose.msra.mxu0 0.0
        %987 = vmatprep.subr.mxu0 0.0
        %988 = vmatpush1.xpose.msra.mxu0 0.0
        %989 = vmatprep.subr.mxu0 0.0
        %990 = vmatpush1.xpose.msra.mxu0 0.0
        %991 = vmatprep.subr.mxu0 0.0
        %992 = vmatpush1.xpose.msra.mxu0 0.0
        %993 = vmatprep.subr.mxu0 0.0
        %994 = vmatpush1.xpose.msra.mxu0 0.0
        %995 = vmatprep.subr.mxu0 0.0
        %996 = vmatpush1.xpose.msra.mxu0 0.0
        %997 = vmatprep.subr.mxu0 0.0
        %998 = vmatpush1.xpose.msra.mxu0 0.0
        %999 = vmatprep.subr.mxu0 0.0
        %1000 = vmatpush1.xpose.msra.mxu0 0.0
        %1001 = vmatprep.subr.mxu0 0.0
        %1002 = vmatpush1.xpose.msra.mxu0 0.0
        %1003 = vmatprep.subr.mxu0 0.0
        %1004 = vmatpush1.xpose.msra.mxu0 0.0
        %1005 = vmatprep.subr.mxu0 0.0
        %1006 = vmatpush1.xpose.msra.mxu0 0.0
        %1007 = vmatprep.subr.mxu0 0.0
        %1008 = vmatpush1.xpose.msra.mxu0 0.0
        %1009 = vmatprep.subr.mxu0 0.0
        %1010 = vmatpush1.xpose.msra.mxu0 0.0
        %1011 = vmatprep.subr.mxu0 0.0
        %1012 = vmatpush1.xpose.msra.mxu0 0.0
        %1013 = vmatprep.subr.mxu0 0.0
        %1014 = vmatpush1.xpose.msra.mxu0 0.0
        %1015 = vmatprep.subr.mxu0 0.0
        %1016 = vmatpush1.xpose.msra.mxu0 0.0
        %1017 = vmatprep.subr.mxu0 0.0
        %1018 = vmatpush1.xpose.msra.mxu0 0.0
        %1019 = vmatprep.subr.mxu0 0.0
        %1020 = vmatpush1.xpose.msra.mxu0 0.0
        %1021 = vmatprep.subr.mxu0 0.0
        %1022 = vmatpush1.xpose.msra.mxu0 0.0
        %1023 = vmatprep.mubr.f32.mxu0 0.0
        %1024 = vmatmul.mubr.f32.gmra.mrb[0].mxu0 %v954
        %v1025 = vpop.f32.mrb[0].mxu0
        %v1026 = vadd.f32 0.0, %v1025
        %v1027 = vpop.f32.mrb[0].mxu0
        %1028 = vdwg.mxu0
        %v1030 = vsel %vm952, %v657, 0
        %v1033 = vsel %vm952, %v803, 0
        %1035 = vmatprep.subr.mxu0 0.0
        %1036 = vmatpush1.xpose.msra.mxu0 %v1033
        %1037 = vmatprep.subr.mxu0 0.0
        %1038 = vmatpush1.xpose.msra.mxu0 0.0
        %1039 = vmatprep.subr.mxu0 0.0
        %1040 = vmatpush1.xpose.msra.mxu0 0.0
        %1041 = vmatprep.subr.mxu0 0.0
        %1042 = vmatpush1.xpose.msra.mxu0 0.0
        %1043 = vmatprep.subr.mxu0 0.0
        %1044 = vmatpush1.xpose.msra.mxu0 0.0
        %1045 = vmatprep.subr.mxu0 0.0
        %1046 = vmatpush1.xpose.msra.mxu0 0.0
        %1047 = vmatprep.subr.mxu0 0.0
        %1048 = vmatpush1.xpose.msra.mxu0 0.0
        %1049 = vmatprep.subr.mxu0 0.0
        %1050 = vmatpush1.xpose.msra.mxu0 0.0
        %1051 = vmatprep.subr.mxu0 0.0
        %1052 = vmatpush1.xpose.msra.mxu0 0.0
        %1053 = vmatprep.subr.mxu0 0.0
        %1054 = vmatpush1.xpose.msra.mxu0 0.0
        %1055 = vmatprep.subr.mxu0 0.0
        %1056 = vmatpush1.xpose.msra.mxu0 0.0
        %1057 = vmatprep.subr.mxu0 0.0
        %1058 = vmatpush1.xpose.msra.mxu0 0.0
        %1059 = vmatprep.subr.mxu0 0.0
        %1060 = vmatpush1.xpose.msra.mxu0 0.0
        %1061 = vmatprep.subr.mxu0 0.0
        %1062 = vmatpush1.xpose.msra.mxu0 0.0
        %1063 = vmatprep.subr.mxu0 0.0
        %1064 = vmatpush1.xpose.msra.mxu0 0.0
        %1065 = vmatprep.subr.mxu0 0.0
        %1066 = vmatpush1.xpose.msra.mxu0 0.0
        %1067 = vmatprep.subr.mxu0 0.0
        %1068 = vmatpush1.xpose.msra.mxu0 0.0
        %1069 = vmatprep.subr.mxu0 0.0
        %1070 = vmatpush1.xpose.msra.mxu0 0.0
        %1071 = vmatprep.subr.mxu0 0.0
        %1072 = vmatpush1.xpose.msra.mxu0 0.0
        %1073 = vmatprep.subr.mxu0 0.0
        %1074 = vmatpush1.xpose.msra.mxu0 0.0
        %1075 = vmatprep.subr.mxu0 0.0
        %1076 = vmatpush1.xpose.msra.mxu0 0.0
        %1077 = vmatprep.subr.mxu0 0.0
        %1078 = vmatpush1.xpose.msra.mxu0 0.0
        %1079 = vmatprep.subr.mxu0 0.0
        %1080 = vmatpush1.xpose.msra.mxu0 0.0
        %1081 = vmatprep.subr.mxu0 0.0
        %1082 = vmatpush1.xpose.msra.mxu0 0.0
        %1083 = vmatprep.subr.mxu0 0.0
        %1084 = vmatpush1.xpose.msra.mxu0 0.0
        %1085 = vmatprep.subr.mxu0 0.0
        %1086 = vmatpush1.xpose.msra.mxu0 0.0
        %1087 = vmatprep.subr.mxu0 0.0
        %1088 = vmatpush1.xpose.msra.mxu0 0.0
        %1089 = vmatprep.subr.mxu0 0.0
        %1090 = vmatpush1.xpose.msra.mxu0 0.0
        %1091 = vmatprep.subr.mxu0 0.0
        %1092 = vmatpush1.xpose.msra.mxu0 0.0
        %1093 = vmatprep.subr.mxu0 0.0
        %1094 = vmatpush1.xpose.msra.mxu0 0.0
        %1095 = vmatprep.subr.mxu0 0.0
        %1096 = vmatpush1.xpose.msra.mxu0 0.0
        %1097 = vmatprep.subr.mxu0 0.0
        %1098 = vmatpush1.xpose.msra.mxu0 0.0
        %1099 = vmatprep.mubr.f32.mxu0 0.0
        %1100 = vmatmul.mubr.f32.gmra.mrb[0].mxu0 %v1030
        %v1101 = vpop.f32.mrb[0].mxu0
        %v1102 = vadd.f32 0.0, %v1101
        %v1103 = vpop.f32.mrb[0].mxu0
        %1104 = vdwg.mxu0
        %v1106 = vsel %vm952, %v658, 0
        %v1109 = vsel %vm952, %v804, 0
        %1111 = vmatprep.subr.mxu0 0.0
        %1112 = vmatpush1.xpose.msra.mxu0 %v1109
        %1113 = vmatprep.subr.mxu0 0.0
        %1114 = vmatpush1.xpose.msra.mxu0 0.0
        %1115 = vmatprep.subr.mxu0 0.0
        %1116 = vmatpush1.xpose.msra.mxu0 0.0
        %1117 = vmatprep.subr.mxu0 0.0
        %1118 = vmatpush1.xpose.msra.mxu0 0.0
        %1119 = vmatprep.subr.mxu0 0.0
        %1120 = vmatpush1.xpose.msra.mxu0 0.0
        %1121 = vmatprep.subr.mxu0 0.0
        %1122 = vmatpush1.xpose.msra.mxu0 0.0
        %1123 = vmatprep.subr.mxu0 0.0
        %1124 = vmatpush1.xpose.msra.mxu0 0.0
        %1125 = vmatprep.subr.mxu0 0.0
        %1126 = vmatpush1.xpose.msra.mxu0 0.0
        %1127 = vmatprep.subr.mxu0 0.0
        %1128 = vmatpush1.xpose.msra.mxu0 0.0
        %1129 = vmatprep.subr.mxu0 0.0
        %1130 = vmatpush1.xpose.msra.mxu0 0.0
        %1131 = vmatprep.subr.mxu0 0.0
        %1132 = vmatpush1.xpose.msra.mxu0 0.0
        %1133 = vmatprep.subr.mxu0 0.0
        %1134 = vmatpush1.xpose.msra.mxu0 0.0
        %1135 = vmatprep.subr.mxu0 0.0
        %1136 = vmatpush1.xpose.msra.mxu0 0.0
        %1137 = vmatprep.subr.mxu0 0.0
        %1138 = vmatpush1.xpose.msra.mxu0 0.0
        %1139 = vmatprep.subr.mxu0 0.0
        %1140 = vmatpush1.xpose.msra.mxu0 0.0
        %1141 = vmatprep.subr.mxu0 0.0
        %1142 = vmatpush1.xpose.msra.mxu0 0.0
        %1143 = vmatprep.subr.mxu0 0.0
        %1144 = vmatpush1.xpose.msra.mxu0 0.0
        %1145 = vmatprep.subr.mxu0 0.0
        %1146 = vmatpush1.xpose.msra.mxu0 0.0
        %1147 = vmatprep.subr.mxu0 0.0
        %1148 = vmatpush1.xpose.msra.mxu0 0.0
        %1149 = vmatprep.subr.mxu0 0.0
        %1150 = vmatpush1.xpose.msra.mxu0 0.0
        %1151 = vmatprep.subr.mxu0 0.0
        %1152 = vmatpush1.xpose.msra.mxu0 0.0
        %1153 = vmatprep.subr.mxu0 0.0
        %1154 = vmatpush1.xpose.msra.mxu0 0.0
        %1155 = vmatprep.subr.mxu0 0.0
        %1156 = vmatpush1.xpose.msra.mxu0 0.0
        %1157 = vmatprep.subr.mxu0 0.0
        %1158 = vmatpush1.xpose.msra.mxu0 0.0
        %1159 = vmatprep.subr.mxu0 0.0
        %1160 = vmatpush1.xpose.msra.mxu0 0.0
        %1161 = vmatprep.subr.mxu0 0.0
        %1162 = vmatpush1.xpose.msra.mxu0 0.0
        %1163 = vmatprep.subr.mxu0 0.0
        %1164 = vmatpush1.xpose.msra.mxu0 0.0
        %1165 = vmatprep.subr.mxu0 0.0
        %1166 = vmatpush1.xpose.msra.mxu0 0.0
        %1167 = vmatprep.subr.mxu0 0.0
        %1168 = vmatpush1.xpose.msra.mxu0 0.0
        %1169 = vmatprep.subr.mxu0 0.0
        %1170 = vmatpush1.xpose.msra.mxu0 0.0
        %1171 = vmatprep.subr.mxu0 0.0
        %1172 = vmatpush1.xpose.msra.mxu0 0.0
        %1173 = vmatprep.subr.mxu0 0.0
        %1174 = vmatpush1.xpose.msra.mxu0 0.0
        %1175 = vmatprep.mubr.f32.mxu0 0.0
        %1176 = vmatmul.mubr.f32.gmra.mrb[0].mxu0 %v1106
        %v1177 = vpop.f32.mrb[0].mxu0
        %v1178 = vadd.f32 0.0, %v1177
        %v1179 = vpop.f32.mrb[0].mxu0
        %1180 = vdwg.mxu0
        %v1182 = vsel %vm952, %v659, 0
        %v1185 = vsel %vm952, %v805, 0
        %1187 = vmatprep.subr.mxu0 0.0
        %1188 = vmatpush1.xpose.msra.mxu0 %v1185
        %1189 = vmatprep.subr.mxu0 0.0
        %1190 = vmatpush1.xpose.msra.mxu0 0.0
        %1191 = vmatprep.subr.mxu0 0.0
        %1192 = vmatpush1.xpose.msra.mxu0 0.0
        %1193 = vmatprep.subr.mxu0 0.0
        %1194 = vmatpush1.xpose.msra.mxu0 0.0
        %1195 = vmatprep.subr.mxu0 0.0
        %1196 = vmatpush1.xpose.msra.mxu0 0.0
        %1197 = vmatprep.subr.mxu0 0.0
        %1198 = vmatpush1.xpose.msra.mxu0 0.0
        %1199 = vmatprep.subr.mxu0 0.0
        %1200 = vmatpush1.xpose.msra.mxu0 0.0
        %1201 = vmatprep.subr.mxu0 0.0
        %1202 = vmatpush1.xpose.msra.mxu0 0.0
        %1203 = vmatprep.subr.mxu0 0.0
        %1204 = vmatpush1.xpose.msra.mxu0 0.0
        %1205 = vmatprep.subr.mxu0 0.0
        %1206 = vmatpush1.xpose.msra.mxu0 0.0
        %1207 = vmatprep.subr.mxu0 0.0
        %1208 = vmatpush1.xpose.msra.mxu0 0.0
        %1209 = vmatprep.subr.mxu0 0.0
        %1210 = vmatpush1.xpose.msra.mxu0 0.0
        %1211 = vmatprep.subr.mxu0 0.0
        %1212 = vmatpush1.xpose.msra.mxu0 0.0
        %1213 = vmatprep.subr.mxu0 0.0
        %1214 = vmatpush1.xpose.msra.mxu0 0.0
        %1215 = vmatprep.subr.mxu0 0.0
        %1216 = vmatpush1.xpose.msra.mxu0 0.0
        %1217 = vmatprep.subr.mxu0 0.0
        %1218 = vmatpush1.xpose.msra.mxu0 0.0
        %1219 = vmatprep.subr.mxu0 0.0
        %1220 = vmatpush1.xpose.msra.mxu0 0.0
        %1221 = vmatprep.subr.mxu0 0.0
        %1222 = vmatpush1.xpose.msra.mxu0 0.0
        %1223 = vmatprep.subr.mxu0 0.0
        %1224 = vmatpush1.xpose.msra.mxu0 0.0
        %1225 = vmatprep.subr.mxu0 0.0
        %1226 = vmatpush1.xpose.msra.mxu0 0.0
        %1227 = vmatprep.subr.mxu0 0.0
        %1228 = vmatpush1.xpose.msra.mxu0 0.0
        %1229 = vmatprep.subr.mxu0 0.0
        %1230 = vmatpush1.xpose.msra.mxu0 0.0
        %1231 = vmatprep.subr.mxu0 0.0
        %1232 = vmatpush1.xpose.msra.mxu0 0.0
        %1233 = vmatprep.subr.mxu0 0.0
        %1234 = vmatpush1.xpose.msra.mxu0 0.0
        %1235 = vmatprep.subr.mxu0 0.0
        %1236 = vmatpush1.xpose.msra.mxu0 0.0
        %1237 = vmatprep.subr.mxu0 0.0
        %1238 = vmatpush1.xpose.msra.mxu0 0.0
        %1239 = vmatprep.subr.mxu0 0.0
        %1240 = vmatpush1.xpose.msra.mxu0 0.0
        %1241 = vmatprep.subr.mxu0 0.0
        %1242 = vmatpush1.xpose.msra.mxu0 0.0
        %1243 = vmatprep.subr.mxu0 0.0
        %1244 = vmatpush1.xpose.msra.mxu0 0.0
        %1245 = vmatprep.subr.mxu0 0.0
        %1246 = vmatpush1.xpose.msra.mxu0 0.0
        %1247 = vmatprep.subr.mxu0 0.0
        %1248 = vmatpush1.xpose.msra.mxu0 0.0
        %1249 = vmatprep.subr.mxu0 0.0
        %1250 = vmatpush1.xpose.msra.mxu0 0.0
        %1251 = vmatprep.mubr.f32.mxu0 0.0
        %1252 = vmatmul.mubr.f32.gmra.mrb[0].mxu0 %v1182
        %v1253 = vpop.f32.mrb[0].mxu0
        %v1254 = vadd.f32 0.0, %v1253
        %v1255 = vpop.f32.mrb[0].mxu0
        %1256 = vdwg.mxu0
        %v1257 = vsel %vm952, %v1026, -inf
        %1258 = vmax.xlane.f32.xlu0 %v1257
        %v1259 = vpop.xlane.xlu0 %1258
        %v1260 = vsel %vm952, %v1102, -inf
        %1261 = vmax.xlane.f32.xlu0 %v1260
        %v1262 = vpop.xlane.xlu0 %1261
        %v1263 = vsel %vm952, %v1178, -inf
        %1264 = vmax.xlane.f32.xlu0 %v1263
        %v1265 = vpop.xlane.xlu0 %1264
        %v1266 = vsel %vm952, %v1254, -inf
        %1267 = vmax.xlane.f32.xlu0 %v1266
        %v1268 = vpop.xlane.xlu0 %1267
        %v1269 = vsub.f32 %v1026, %v1259
        %v1270 = vsub.f32 %v1102, %v1262
        %v1271 = vsub.f32 %v1178, %v1265
        %v1272 = vsub.f32 %v1254, %v1268
        %v1273 = vmul.f32 %v1269, 1.442695
        %v1274 = vpow.pop %v1273
        %v1275 = vmul.f32 %v1270, 1.442695
        %v1276 = vpow.pop %v1275
        %v1277 = vmul.f32 %v1271, 1.442695
        %v1278 = vpow.pop %v1277
        %v1279 = vmul.f32 %v1272, 1.442695
        %v1280 = vpow.pop %v1279
        %v1281 = vsel %vm952, %v1274, 0.0
        %1282 = vadd.xlane.f32.xlu0 %v1281
        %v1283 = vpop.xlane.xlu0 %1282
        %v1284 = vsel %vm952, %v1276, 0.0
        %1285 = vadd.xlane.f32.xlu0 %v1284
        %v1286 = vpop.xlane.xlu0 %1285
        %v1287 = vsel %vm952, %v1278, 0.0
        %1288 = vadd.xlane.f32.xlu0 %v1287
        %v1289 = vpop.xlane.xlu0 %1288
        %v1290 = vsel %vm952, %v1280, 0.0
        %1291 = vadd.xlane.f32.xlu0 %v1290
        %v1292 = vpop.xlane.xlu0 %1291
        %v1293 = vrcp.pop %v1283
        %v1294 = vmul.f32 %v1274, %v1293
        %v1295 = vrcp.pop %v1286
        %v1296 = vmul.f32 %v1276, %v1295
        %v1297 = vrcp.pop %v1289
        %v1298 = vmul.f32 %v1278, %v1297
        %v1299 = vrcp.pop %v1292
        %v1300 = vmul.f32 %v1280, %v1299
        %v1302 = vsel %vm952, %v1294, 0
        %1304 = vmatprep.subr.mxu0 0.0
        %1305 = vmatpush1.msra.mxu0 %v948
        %1306 = vmatprep.subr.mxu0 0.0
        %1307 = vmatpush1.msra.mxu0 0.0
        %1308 = vmatprep.subr.mxu0 0.0
        %1309 = vmatpush1.msra.mxu0 0.0
        %1310 = vmatprep.subr.mxu0 0.0
        %1311 = vmatpush1.msra.mxu0 0.0
        %1312 = vmatprep.subr.mxu0 0.0
        %1313 = vmatpush1.msra.mxu0 0.0
        %1314 = vmatprep.subr.mxu0 0.0
        %1315 = vmatpush1.msra.mxu0 0.0
        %1316 = vmatprep.subr.mxu0 0.0
        %1317 = vmatpush1.msra.mxu0 0.0
        %1318 = vmatprep.subr.mxu0 0.0
        %1319 = vmatpush1.msra.mxu0 0.0
        %1320 = vmatprep.subr.mxu0 0.0
        %1321 = vmatpush1.msra.mxu0 0.0
        %1322 = vmatprep.subr.mxu0 0.0
        %1323 = vmatpush1.msra.mxu0 0.0
        %1324 = vmatprep.subr.mxu0 0.0
        %1325 = vmatpush1.msra.mxu0 0.0
        %1326 = vmatprep.subr.mxu0 0.0
        %1327 = vmatpush1.msra.mxu0 0.0
        %1328 = vmatprep.subr.mxu0 0.0
        %1329 = vmatpush1.msra.mxu0 0.0
        %1330 = vmatprep.subr.mxu0 0.0
        %1331 = vmatpush1.msra.mxu0 0.0
        %1332 = vmatprep.subr.mxu0 0.0
        %1333 = vmatpush1.msra.mxu0 0.0
        %1334 = vmatprep.subr.mxu0 0.0
        %1335 = vmatpush1.msra.mxu0 0.0
        %1336 = vmatprep.subr.mxu0 0.0
        %1337 = vmatpush1.msra.mxu0 0.0
        %1338 = vmatprep.subr.mxu0 0.0
        %1339 = vmatpush1.msra.mxu0 0.0
        %1340 = vmatprep.subr.mxu0 0.0
        %1341 = vmatpush1.msra.mxu0 0.0
        %1342 = vmatprep.subr.mxu0 0.0
        %1343 = vmatpush1.msra.mxu0 0.0
        %1344 = vmatprep.subr.mxu0 0.0
        %1345 = vmatpush1.msra.mxu0 0.0
        %1346 = vmatprep.subr.mxu0 0.0
        %1347 = vmatpush1.msra.mxu0 0.0
        %1348 = vmatprep.subr.mxu0 0.0
        %1349 = vmatpush1.msra.mxu0 0.0
        %1350 = vmatprep.subr.mxu0 0.0
        %1351 = vmatpush1.msra.mxu0 0.0
        %1352 = vmatprep.subr.mxu0 0.0
        %1353 = vmatpush1.msra.mxu0 0.0
        %1354 = vmatprep.subr.mxu0 0.0
        %1355 = vmatpush1.msra.mxu0 0.0
        %1356 = vmatprep.subr.mxu0 0.0
        %1357 = vmatpush1.msra.mxu0 0.0
        %1358 = vmatprep.subr.mxu0 0.0
        %1359 = vmatpush1.msra.mxu0 0.0
        %1360 = vmatprep.subr.mxu0 0.0
        %1361 = vmatpush1.msra.mxu0 0.0
        %1362 = vmatprep.subr.mxu0 0.0
        %1363 = vmatpush1.msra.mxu0 0.0
        %1364 = vmatprep.subr.mxu0 0.0
        %1365 = vmatpush1.msra.mxu0 0.0
        %1366 = vmatprep.subr.mxu0 0.0
        %1367 = vmatpush1.msra.mxu0 0.0
        %1368 = vmatprep.mubr.f32.mxu0 0.0
        %1369 = vmatmul.mubr.f32.gmra.mrb[0].mxu0 %v1302
        %v1370 = vpop.f32.mrb[0].mxu0
        %v1371 = vadd.f32 0.0, %v1370
        %v1372 = vpop.f32.mrb[0].mxu0
        %1373 = vdwg.mxu0
        %v1375 = vsel %vm952, %v1296, 0
        %1377 = vmatprep.subr.mxu0 0.0
        %1378 = vmatpush1.msra.mxu0 %v949
        %1379 = vmatprep.subr.mxu0 0.0
        %1380 = vmatpush1.msra.mxu0 0.0
        %1381 = vmatprep.subr.mxu0 0.0
        %1382 = vmatpush1.msra.mxu0 0.0
        %1383 = vmatprep.subr.mxu0 0.0
        %1384 = vmatpush1.msra.mxu0 0.0
        %1385 = vmatprep.subr.mxu0 0.0
        %1386 = vmatpush1.msra.mxu0 0.0
        %1387 = vmatprep.subr.mxu0 0.0
        %1388 = vmatpush1.msra.mxu0 0.0
        %1389 = vmatprep.subr.mxu0 0.0
        %1390 = vmatpush1.msra.mxu0 0.0
        %1391 = vmatprep.subr.mxu0 0.0
        %1392 = vmatpush1.msra.mxu0 0.0
        %1393 = vmatprep.subr.mxu0 0.0
        %1394 = vmatpush1.msra.mxu0 0.0
        %1395 = vmatprep.subr.mxu0 0.0
        %1396 = vmatpush1.msra.mxu0 0.0
        %1397 = vmatprep.subr.mxu0 0.0
        %1398 = vmatpush1.msra.mxu0 0.0
        %1399 = vmatprep.subr.mxu0 0.0
        %1400 = vmatpush1.msra.mxu0 0.0
        %1401 = vmatprep.subr.mxu0 0.0
        %1402 = vmatpush1.msra.mxu0 0.0
        %1403 = vmatprep.subr.mxu0 0.0
        %1404 = vmatpush1.msra.mxu0 0.0
        %1405 = vmatprep.subr.mxu0 0.0
        %1406 = vmatpush1.msra.mxu0 0.0
        %1407 = vmatprep.subr.mxu0 0.0
        %1408 = vmatpush1.msra.mxu0 0.0
        %1409 = vmatprep.subr.mxu0 0.0
        %1410 = vmatpush1.msra.mxu0 0.0
        %1411 = vmatprep.subr.mxu0 0.0
        %1412 = vmatpush1.msra.mxu0 0.0
        %1413 = vmatprep.subr.mxu0 0.0
        %1414 = vmatpush1.msra.mxu0 0.0
        %1415 = vmatprep.subr.mxu0 0.0
        %1416 = vmatpush1.msra.mxu0 0.0
        %1417 = vmatprep.subr.mxu0 0.0
        %1418 = vmatpush1.msra.mxu0 0.0
        %1419 = vmatprep.subr.mxu0 0.0
        %1420 = vmatpush1.msra.mxu0 0.0
        %1421 = vmatprep.subr.mxu0 0.0
        %1422 = vmatpush1.msra.mxu0 0.0
        %1423 = vmatprep.subr.mxu0 0.0
        %1424 = vmatpush1.msra.mxu0 0.0
        %1425 = vmatprep.subr.mxu0 0.0
        %1426 = vmatpush1.msra.mxu0 0.0
        %1427 = vmatprep.subr.mxu0 0.0
        %1428 = vmatpush1.msra.mxu0 0.0
        %1429 = vmatprep.subr.mxu0 0.0
        %1430 = vmatpush1.msra.mxu0 0.0
        %1431 = vmatprep.subr.mxu0 0.0
        %1432 = vmatpush1.msra.mxu0 0.0
        %1433 = vmatprep.subr.mxu0 0.0
        %1434 = vmatpush1.msra.mxu0 0.0
        %1435 = vmatprep.subr.mxu0 0.0
        %1436 = vmatpush1.msra.mxu0 0.0
        %1437 = vmatprep.subr.mxu0 0.0
        %1438 = vmatpush1.msra.mxu0 0.0
        %1439 = vmatprep.subr.mxu0 0.0
        %1440 = vmatpush1.msra.mxu0 0.0
        %1441 = vmatprep.mubr.f32.mxu0 0.0
        %1442 = vmatmul.mubr.f32.gmra.mrb[0].mxu0 %v1375
        %v1443 = vpop.f32.mrb[0].mxu0
        %v1444 = vadd.f32 0.0, %v1443
        %v1445 = vpop.f32.mrb[0].mxu0
        %1446 = vdwg.mxu0
        %v1448 = vsel %vm952, %v1298, 0
        %1450 = vmatprep.subr.mxu0 0.0
        %1451 = vmatpush1.msra.mxu0 %v950
        %1452 = vmatprep.subr.mxu0 0.0
        %1453 = vmatpush1.msra.mxu0 0.0
        %1454 = vmatprep.subr.mxu0 0.0
        %1455 = vmatpush1.msra.mxu0 0.0
        %1456 = vmatprep.subr.mxu0 0.0
        %1457 = vmatpush1.msra.mxu0 0.0
        %1458 = vmatprep.subr.mxu0 0.0
        %1459 = vmatpush1.msra.mxu0 0.0
        %1460 = vmatprep.subr.mxu0 0.0
        %1461 = vmatpush1.msra.mxu0 0.0
        %1462 = vmatprep.subr.mxu0 0.0
        %1463 = vmatpush1.msra.mxu0 0.0
        %1464 = vmatprep.subr.mxu0 0.0
        %1465 = vmatpush1.msra.mxu0 0.0
        %1466 = vmatprep.subr.mxu0 0.0
        %1467 = vmatpush1.msra.mxu0 0.0
        %1468 = vmatprep.subr.mxu0 0.0
        %1469 = vmatpush1.msra.mxu0 0.0
        %1470 = vmatprep.subr.mxu0 0.0
        %1471 = vmatpush1.msra.mxu0 0.0
        %1472 = vmatprep.subr.mxu0 0.0
        %1473 = vmatpush1.msra.mxu0 0.0
        %1474 = vmatprep.subr.mxu0 0.0
        %1475 = vmatpush1.msra.mxu0 0.0
        %1476 = vmatprep.subr.mxu0 0.0
        %1477 = vmatpush1.msra.mxu0 0.0
        %1478 = vmatprep.subr.mxu0 0.0
        %1479 = vmatpush1.msra.mxu0 0.0
        %1480 = vmatprep.subr.mxu0 0.0
        %1481 = vmatpush1.msra.mxu0 0.0
        %1482 = vmatprep.subr.mxu0 0.0
        %1483 = vmatpush1.msra.mxu0 0.0
        %1484 = vmatprep.subr.mxu0 0.0
        %1485 = vmatpush1.msra.mxu0 0.0
        %1486 = vmatprep.subr.mxu0 0.0
        %1487 = vmatpush1.msra.mxu0 0.0
        %1488 = vmatprep.subr.mxu0 0.0
        %1489 = vmatpush1.msra.mxu0 0.0
        %1490 = vmatprep.subr.mxu0 0.0
        %1491 = vmatpush1.msra.mxu0 0.0
        %1492 = vmatprep.subr.mxu0 0.0
        %1493 = vmatpush1.msra.mxu0 0.0
        %1494 = vmatprep.subr.mxu0 0.0
        %1495 = vmatpush1.msra.mxu0 0.0
        %1496 = vmatprep.subr.mxu0 0.0
        %1497 = vmatpush1.msra.mxu0 0.0
        %1498 = vmatprep.subr.mxu0 0.0
        %1499 = vmatpush1.msra.mxu0 0.0
        %1500 = vmatprep.subr.mxu0 0.0
        %1501 = vmatpush1.msra.mxu0 0.0
        %1502 = vmatprep.subr.mxu0 0.0
        %1503 = vmatpush1.msra.mxu0 0.0
        %1504 = vmatprep.subr.mxu0 0.0
        %1505 = vmatpush1.msra.mxu0 0.0
        %1506 = vmatprep.subr.mxu0 0.0
        %1507 = vmatpush1.msra.mxu0 0.0
        %1508 = vmatprep.subr.mxu0 0.0
        %1509 = vmatpush1.msra.mxu0 0.0
        %1510 = vmatprep.subr.mxu0 0.0
        %1511 = vmatpush1.msra.mxu0 0.0
        %1512 = vmatprep.subr.mxu0 0.0
        %1513 = vmatpush1.msra.mxu0 0.0
        %1514 = vmatprep.mubr.f32.mxu0 0.0
        %1515 = vmatmul.mubr.f32.gmra.mrb[0].mxu0 %v1448
        %v1516 = vpop.f32.mrb[0].mxu0
        %v1517 = vadd.f32 0.0, %v1516
        %v1518 = vpop.f32.mrb[0].mxu0
        %1519 = vdwg.mxu0
        %v1521 = vsel %vm952, %v1300, 0
        %1523 = vmatprep.subr.mxu0 0.0
        %1524 = vmatpush1.msra.mxu0 %v951
        %1525 = vmatprep.subr.mxu0 0.0
        %1526 = vmatpush1.msra.mxu0 0.0
        %1527 = vmatprep.subr.mxu0 0.0
        %1528 = vmatpush1.msra.mxu0 0.0
        %1529 = vmatprep.subr.mxu0 0.0
        %1530 = vmatpush1.msra.mxu0 0.0
        %1531 = vmatprep.subr.mxu0 0.0
        %1532 = vmatpush1.msra.mxu0 0.0
        %1533 = vmatprep.subr.mxu0 0.0
        %1534 = vmatpush1.msra.mxu0 0.0
        %1535 = vmatprep.subr.mxu0 0.0
        %1536 = vmatpush1.msra.mxu0 0.0
        %1537 = vmatprep.subr.mxu0 0.0
        %1538 = vmatpush1.msra.mxu0 0.0
        %1539 = vmatprep.subr.mxu0 0.0
        %1540 = vmatpush1.msra.mxu0 0.0
        %1541 = vmatprep.subr.mxu0 0.0
        %1542 = vmatpush1.msra.mxu0 0.0
        %1543 = vmatprep.subr.mxu0 0.0
        %1544 = vmatpush1.msra.mxu0 0.0
        %1545 = vmatprep.subr.mxu0 0.0
        %1546 = vmatpush1.msra.mxu0 0.0
        %1547 = vmatprep.subr.mxu0 0.0
        %1548 = vmatpush1.msra.mxu0 0.0
        %1549 = vmatprep.subr.mxu0 0.0
        %1550 = vmatpush1.msra.mxu0 0.0
        %1551 = vmatprep.subr.mxu0 0.0
        %1552 = vmatpush1.msra.mxu0 0.0
        %1553 = vmatprep.subr.mxu0 0.0
        %1554 = vmatpush1.msra.mxu0 0.0
        %1555 = vmatprep.subr.mxu0 0.0
        %1556 = vmatpush1.msra.mxu0 0.0
        %1557 = vmatprep.subr.mxu0 0.0
        %1558 = vmatpush1.msra.mxu0 0.0
        %1559 = vmatprep.subr.mxu0 0.0
        %1560 = vmatpush1.msra.mxu0 0.0
        %1561 = vmatprep.subr.mxu0 0.0
        %1562 = vmatpush1.msra.mxu0 0.0
        %1563 = vmatprep.subr.mxu0 0.0
        %1564 = vmatpush1.msra.mxu0 0.0
        %1565 = vmatprep.subr.mxu0 0.0
        %1566 = vmatpush1.msra.mxu0 0.0
        %1567 = vmatprep.subr.mxu0 0.0
        %1568 = vmatpush1.msra.mxu0 0.0
        %1569 = vmatprep.subr.mxu0 0.0
        %1570 = vmatpush1.msra.mxu0 0.0
        %1571 = vmatprep.subr.mxu0 0.0
        %1572 = vmatpush1.msra.mxu0 0.0
        %1573 = vmatprep.subr.mxu0 0.0
        %1574 = vmatpush1.msra.mxu0 0.0
        %1575 = vmatprep.subr.mxu0 0.0
        %1576 = vmatpush1.msra.mxu0 0.0
        %1577 = vmatprep.subr.mxu0 0.0
        %1578 = vmatpush1.msra.mxu0 0.0
        %1579 = vmatprep.subr.mxu0 0.0
        %1580 = vmatpush1.msra.mxu0 0.0
        %1581 = vmatprep.subr.mxu0 0.0
        %1582 = vmatpush1.msra.mxu0 0.0
        %1583 = vmatprep.subr.mxu0 0.0
        %1584 = vmatpush1.msra.mxu0 0.0
        %1585 = vmatprep.subr.mxu0 0.0
        %1586 = vmatpush1.msra.mxu0 0.0
        %1587 = vmatprep.mubr.f32.mxu0 0.0
        %1588 = vmatmul.mubr.f32.gmra.mrb[0].mxu0 %v1521
        %v1589 = vpop.f32.mrb[0].mxu0
        %v1590 = vadd.f32 0.0, %v1589
        %v1591 = vpop.f32.mrb[0].mxu0
        %1592 = vdwg.mxu0
        %v1593 = vcombine.low %v1371, %v1517
        %v1594 = vcombine.high %v1371, %v1517
        %v1596 = vunpack.c.l.s4 1983009808
        %v1597 = vunpack.c.0.s8 %v1596
        %v1598 = vlaneseq
        %v1599 = vshrl.u32 %v1598, 7
        %v1600 = vsub.s32 %v1597, %v1599
        %v1601 = vrot.slane %v1593, %v1600
        %v1603 = vunpack.c.l.s4 1983009808
        %v1604 = vunpack.c.0.s8 %v1603
        %v1605 = vlaneseq
        %v1606 = vshrl.u32 %v1605, 7
        %v1607 = vsub.s32 %v1604, %v1606
        %v1608 = vrot.slane %v1594, %v1607
        %v1609 = vcombine.low %v1444, %v1590
        %v1610 = vcombine.high %v1444, %v1590
        %v1612 = vunpack.c.l.s4 1983009808
        %v1613 = vunpack.c.0.s8 %v1612
        %v1614 = vlaneseq
        %v1615 = vshrl.u32 %v1614, 7
        %v1616 = vsub.s32 %v1613, %v1615
        %v1617 = vrot.slane %v1609, %v1616
        %v1619 = vunpack.c.l.s4 1983009808
        %v1620 = vunpack.c.0.s8 %v1619
        %v1621 = vlaneseq
        %v1622 = vshrl.u32 %v1621, 7
        %v1623 = vsub.s32 %v1620, %v1622
        %v1624 = vrot.slane %v1610, %v1623
        %v1625 = vcombine.low %v1601, %v1617
        %v1626 = vcombine.high %v1601, %v1617
        %v1628 = vunpack.c.l.s4 1934713408
        %v1629 = vunpack.c.0.s8 %v1628
        %v1630 = vlaneseq
        %v1631 = vshrl.u32 %v1630, 7
        %v1632 = vsub.s32 %v1629, %v1631
        %v1633 = vrot.slane %v1625, %v1632
        %v1635 = vunpack.c.l.s4 1934713408
        %v1636 = vunpack.c.0.s8 %v1635
        %v1637 = vlaneseq
        %v1638 = vshrl.u32 %v1637, 7
        %v1639 = vsub.s32 %v1636, %v1638
        %v1640 = vrot.slane %v1626, %v1639
        %v1641 = vcombine.low %v1608, %v1624
        %v1642 = vcombine.high %v1608, %v1624
        %v1644 = vunpack.c.l.s4 1934713408
        %v1645 = vunpack.c.0.s8 %v1644
        %v1646 = vlaneseq
        %v1647 = vshrl.u32 %v1646, 7
        %v1648 = vsub.s32 %v1645, %v1647
        %v1649 = vrot.slane %v1641, %v1648
        %v1651 = vunpack.c.l.s4 1934713408
        %v1652 = vunpack.c.0.s8 %v1651
        %v1653 = vlaneseq
        %v1654 = vshrl.u32 %v1653, 7
        %v1655 = vsub.s32 %v1652, %v1654
        %v1656 = vrot.slane %v1642, %v1655
        %v1657 = vcombine.high %v1633, 0.0
        %v1658 = vcombine.high %v1640, 0.0
        %v1659 = vcombine.high %v1649, 0.0
        %v1660 = vcombine.high %v1656, 0.0
        %v1661 = vcombine.low %v1633, %v1640
        %v1663 = vunpack.c.l.s4 1983009808
        %v1664 = vunpack.c.0.s8 %v1663
        %v1665 = vlaneseq
        %v1666 = vshrl.u32 %v1665, 7
        %v1667 = vsub.s32 %v1664, %v1666
        %v1668 = vrot.slane %v1661, %v1667
        %v1669 = vcombine.low %v1657, %v1658
        %v1671 = vunpack.c.l.s4 1983009808
        %v1672 = vunpack.c.0.s8 %v1671
        %v1673 = vlaneseq
        %v1674 = vshrl.u32 %v1673, 7
        %v1675 = vsub.s32 %v1672, %v1674
        %v1676 = vrot.slane %v1669, %v1675
        %v1677 = vcombine.low %v1649, %v1656
        %v1679 = vunpack.c.l.s4 1983009808
        %v1680 = vunpack.c.0.s8 %v1679
        %v1681 = vlaneseq
        %v1682 = vshrl.u32 %v1681, 7
        %v1683 = vsub.s32 %v1680, %v1682
        %v1684 = vrot.slane %v1677, %v1683
        %v1685 = vcombine.low %v1659, %v1660
        %v1687 = vunpack.c.l.s4 1983009808
        %v1688 = vunpack.c.0.s8 %v1687
        %v1689 = vlaneseq
        %v1690 = vshrl.u32 %v1689, 7
        %v1691 = vsub.s32 %v1688, %v1690
        %v1692 = vrot.slane %v1685, %v1691
        %v1693 = vcombine.low %v1668, %v1676
        %v1694 = vcombine.high %v1668, %v1676
        %v1696 = vunpack.c.l.s4 1934713408
        %v1697 = vunpack.c.0.s8 %v1696
        %v1698 = vlaneseq
        %v1699 = vshrl.u32 %v1698, 7
        %v1700 = vsub.s32 %v1697, %v1699
        %v1701 = vrot.slane %v1693, %v1700
        %v1703 = vunpack.c.l.s4 1934713408
        %v1704 = vunpack.c.0.s8 %v1703
        %v1705 = vlaneseq
        %v1706 = vshrl.u32 %v1705, 7
        %v1707 = vsub.s32 %v1704, %v1706
        %v1708 = vrot.slane %v1694, %v1707
        %v1709 = vcombine.low %v1684, %v1692
        %v1710 = vcombine.high %v1684, %v1692
        %v1712 = vunpack.c.l.s4 1934713408
        %v1713 = vunpack.c.0.s8 %v1712
        %v1714 = vlaneseq
        %v1715 = vshrl.u32 %v1714, 7
        %v1716 = vsub.s32 %v1713, %v1715
        %v1717 = vrot.slane %v1709, %v1716
        %v1719 = vunpack.c.l.s4 1934713408
        %v1720 = vunpack.c.0.s8 %v1719
        %v1721 = vlaneseq
        %v1722 = vshrl.u32 %v1721, 7
        %v1723 = vsub.s32 %v1720, %v1722
        %v1724 = vrot.slane %v1710, %v1723
        %v1725 = vcombine.low %v1701, %v1717
        %v1726 = vcombine.high %v1701, %v1717
        %v1727 = vcombine.low %v1708, %v1724
        %v1728 = vcombine.high %v1708, %v1724
        %1730 = vrot.lane.b32.xlu0 %v1726, 8
        %v1731 = vpop.permute.xlu0 %1730
        %1734 = vrot.lane.b32.xlu0 %v1727, 16
        %v1735 = vpop.permute.xlu0 %1734
        %1738 = vrot.lane.b32.xlu0 %v1728, 24
        %v1739 = vpop.permute.xlu0 %1738
        %v1741 = vsel %vm952, %v1725, %v1731
        %vm1742 = vcmask 130048
        %v1743 = vsel %vm1742, %v1741, %v1735
        %vm1744 = vcmask 195584
        %v1745 = vsel %vm1744, %v1743, %v1739
        %s1746 = scalar_lea.vmem %s3, 96
        %v1747 = vld [vmem:[%s1746] sm:$0xff]
        %v1748 = vld [vmem:[%s1746 + $0x8] sm:$0xff]
        %v1749 = vld [vmem:[%s1746 + $0x10] sm:$0xff]
        %v1750 = vld [vmem:[%s1746 + $0x18] sm:$0xff]
        %s1751 = scalar_lea.vmem %s4, 3
        %v1752 = vld [vmem:[%s1751] sm:$0x1]
        %v1754 = vlaneseq
        %v1755 = vshrl.u32 %v1754, 7
        %v1756 = vsub.s32 0, %v1755
        %v1757 = vrot.slane %v1752, %v1756
        %v1760 = vsel %vm266, %v1745, 0
        %1762 = vmatprep.subr.mxu0 0.0
        %1763 = vmatpush1.msra.mxu0 %v1747
        %1764 = vmatprep.subr.mxu0 0.0
        %1765 = vmatpush1.msra.mxu0 %v1748
        %1766 = vmatprep.subr.mxu0 0.0
        %1767 = vmatpush1.msra.mxu0 %v1749
        %1768 = vmatprep.subr.mxu0 0.0
        %1769 = vmatpush1.msra.mxu0 %v1750
        %1770 = vmatprep.subr.mxu0 0.0
        %1771 = vmatpush1.msra.mxu0 0.0
        %1772 = vmatprep.subr.mxu0 0.0
        %1773 = vmatpush1.msra.mxu0 0.0
        %1774 = vmatprep.subr.mxu0 0.0
        %1775 = vmatpush1.msra.mxu0 0.0
        %1776 = vmatprep.subr.mxu0 0.0
        %1777 = vmatpush1.msra.mxu0 0.0
        %1778 = vmatprep.subr.mxu0 0.0
        %1779 = vmatpush1.msra.mxu0 0.0
        %1780 = vmatprep.subr.mxu0 0.0
        %1781 = vmatpush1.msra.mxu0 0.0
        %1782 = vmatprep.subr.mxu0 0.0
        %1783 = vmatpush1.msra.mxu0 0.0
        %1784 = vmatprep.subr.mxu0 0.0
        %1785 = vmatpush1.msra.mxu0 0.0
        %1786 = vmatprep.subr.mxu0 0.0
        %1787 = vmatpush1.msra.mxu0 0.0
        %1788 = vmatprep.subr.mxu0 0.0
        %1789 = vmatpush1.msra.mxu0 0.0
        %1790 = vmatprep.subr.mxu0 0.0
        %1791 = vmatpush1.msra.mxu0 0.0
        %1792 = vmatprep.subr.mxu0 0.0
        %1793 = vmatpush1.msra.mxu0 0.0
        %1794 = vmatprep.subr.mxu0 0.0
        %1795 = vmatpush1.msra.mxu0 0.0
        %1796 = vmatprep.subr.mxu0 0.0
        %1797 = vmatpush1.msra.mxu0 0.0
        %1798 = vmatprep.subr.mxu0 0.0
        %1799 = vmatpush1.msra.mxu0 0.0
        %1800 = vmatprep.subr.mxu0 0.0
        %1801 = vmatpush1.msra.mxu0 0.0
        %1802 = vmatprep.subr.mxu0 0.0
        %1803 = vmatpush1.msra.mxu0 0.0
        %1804 = vmatprep.subr.mxu0 0.0
        %1805 = vmatpush1.msra.mxu0 0.0
        %1806 = vmatprep.subr.mxu0 0.0
        %1807 = vmatpush1.msra.mxu0 0.0
        %1808 = vmatprep.subr.mxu0 0.0
        %1809 = vmatpush1.msra.mxu0 0.0
        %1810 = vmatprep.subr.mxu0 0.0
        %1811 = vmatpush1.msra.mxu0 0.0
        %1812 = vmatprep.subr.mxu0 0.0
        %1813 = vmatpush1.msra.mxu0 0.0
        %1814 = vmatprep.subr.mxu0 0.0
        %1815 = vmatpush1.msra.mxu0 0.0
        %1816 = vmatprep.subr.mxu0 0.0
        %1817 = vmatpush1.msra.mxu0 0.0
        %1818 = vmatprep.subr.mxu0 0.0
        %1819 = vmatpush1.msra.mxu0 0.0
        %1820 = vmatprep.subr.mxu0 0.0
        %1821 = vmatpush1.msra.mxu0 0.0
        %1822 = vmatprep.subr.mxu0 0.0
        %1823 = vmatpush1.msra.mxu0 0.0
        %1824 = vmatprep.subr.mxu0 0.0
        %1825 = vmatpush1.msra.mxu0 0.0
        %1826 = vmatprep.mubr.f32.mxu0 0.0
        %1827 = vmatmul.mubr.f32.gmra.mrb[0].mxu0 %v1760
        %v1828 = vpop.f32.mrb[0].mxu0
        %v1829 = vadd.f32 %v1757, %v1828
        %v1830 = vpop.f32.mrb[0].mxu0
        %1831 = vdwg.mxu0
        %1832 = vst.msk [vmem:[%s241] sm:$0xff] %vm266, %v1829
        %s1833 = sand.u32 %s147, 1
        %s1834 = scalar_lea.sflag [#allocation3], %s1833
        %s1835 = sand.u32 %s147, 1
        %s1836 = smul.addr %s1835, 8
        %s1837 = scalar_lea.vmem [#allocation2], %s1836
        // Predicated region
        $region41: #{multi_head_attention.1} parent=39 // pred_check
          %p1838 = pneg %p157
        $region42: #{multi_head_attention.1} parent=39 // pred_check_branch
          %1840 = sbr.rel (%p1838) target = $region44
        $region43: #{multi_head_attention.1} parent=39 // pred_region
          %s1842 = ssub.s32 128, 128
          %1843 = vsyncadd %s1834, %s1842
          %s1844 = smul.addr %s19, 128
          %s1845 = scalar_lea.hbm %s5, %s1844
          %s1847 = sshll.u32 %s1837, 4
          %s1848 = int_to_ptr.vmem [resolvable:$true] %s1847
          %1850 = dma.vmem_to_hbm [thread:$0]  %s1848, 128, %s1845, %s1834
        $region44: #{multi_head_attention.1} parent=39 // pred_fallthru
          _
      $region40: #{multi_head_attention.1} parent=5 // pred_fallthru
        _
      %p1851 = scmp.le.s32.totalorder 2, %s14
      // Predicated region
      $region45: #{multi_head_attention.1} parent=5 // pred_check
        %p1852 = pneg %p1851
      $region46: #{multi_head_attention.1} parent=5 // pred_check_branch
        %1854 = sbr.rel (%p1852) target = $region48
      $region47: #{multi_head_attention.1} parent=5 // pred_region
        %s1855 = ssub.s32 %s14, 2
        // Predicated region
        $region49: #{multi_head_attention.1} parent=47 // pred_check
          %p1856 = pneg %p163
        $region50: #{multi_head_attention.1} parent=47 // pred_check_branch
          %1858 = sbr.rel (%p1856) target = $region52
        $region51: #{multi_head_attention.1} parent=47 // pred_region
          %s1859 = sand.u32 %s148, 1
          %s1860 = scalar_lea.sflag [#allocation3], %s1859
          %s1861 = sand.u32 %s148, 1
          %s1862 = smul.addr %s1861, 8
          %s1863 = scalar_lea.vmem [#allocation2], %s1862
          %1864 = dma.done %s1860, 128
        $region52: #{multi_head_attention.1} parent=47 // pred_fallthru
          _
      $region48: #{multi_head_attention.1} parent=5 // pred_fallthru
        _
    $region6: #{multi_head_attention.1} parent=1 // loop_footer
      %s18 = sadd.s32 1, %s14
    $region7: #{multi_head_attention.1} parent=1 // loop_footer_branch
      %13 = sbr.rel target = $region3
    $region8: #{multi_head_attention.1} parent=1 // loop_exit
      _
    %1865 = vsyncpa [#allocation3], 1
    %s1866 = scalar_lea.sflag [#allocation3], 1
    %1867 = vsyncpa %s1866, 1

</llo_original>
